<compile_context>
chip_gen: v5e
topology: v5e:2x2
jax: 0.10.0
libtpu: 0.0.40
codegen_flags: <defaults>
</compile_context>

<pallas_src>
import functools

import jax
import jax.numpy as jnp
import numpy as np
from jax.experimental import pallas as pl
from jax.experimental.pallas import tpu as pltpu


def _critic_kernel(
    xu_ref,      # (tb, S+A)
    w1_ref,      # (S+A, 400)
    w4_ref,      # (S+A, 400)
    b14_ref,     # (2, 400)   row 0 = b1, row 1 = b4
    w2_ref,      # (400, 300)
    w5_ref,      # (400, 300)
    b25_ref,     # (2, 300)   row 0 = b2, row 1 = b5
    w36_ref,     # (2, 300)   row 0 = w3^T, row 1 = w6^T
    b36_ref,     # (1, 2)     [b3, b6]
    q_ref,       # (tb, 128)  lane-dense output; cols 0/1 = q1/q2, rest zero
):
    xu = xu_ref[...]                       # (tb, d_in), d_in = S+A = 8
    d_in = xu_ref.shape[1]

    # ---- layer_1 / layer_4 on the VPU ----
    # K is tiny (8), so an MXU pass would be <6% useful; do an unrolled
    # broadcast multiply-accumulate over the 8 input features instead, touching
    # only the 400 live output columns of each branch.
    h1 = xu[:, 0:1] * w1_ref[0:1, :]
    h2 = xu[:, 0:1] * w4_ref[0:1, :]
    for k in range(1, d_in):               # static unroll (d_in = 8)
        h1 = h1 + xu[:, k:k + 1] * w1_ref[k:k + 1, :]
        h2 = h2 + xu[:, k:k + 1] * w4_ref[k:k + 1, :]
    h1 = jnp.maximum(h1 + b14_ref[0:1, :], 0.0)    # (tb, 400)
    h2 = jnp.maximum(h2 + b14_ref[1:2, :], 0.0)    # (tb, 400)

    # ---- layer_2 / layer_5 on the MXU (K = 400) ----
    g1 = jnp.dot(h1, w2_ref[...], preferred_element_type=jnp.float32) + b25_ref[0:1, :]
    g1 = jnp.maximum(g1, 0.0)
    g2 = jnp.dot(h2, w5_ref[...], preferred_element_type=jnp.float32) + b25_ref[1:2, :]
    g2 = jnp.maximum(g2, 0.0)

    # ---- layer_3 / layer_6: N = 1 heads -> VPU multiply + cross-lane reduce ----
    q1 = jnp.sum(g1 * w36_ref[0:1, :], axis=-1, keepdims=True)   # (tb, 1)
    q2 = jnp.sum(g2 * w36_ref[1:2, :], axis=-1, keepdims=True)   # (tb, 1)
    q = jnp.concatenate([q1, q2], axis=-1) + b36_ref[...]        # (tb, 2)

    # Lane-dense store: pad to the full 128-wide block so the output path uses
    # unmasked full-vreg stores (no vst.msk per 8-row group).
    fill = jnp.zeros((q.shape[0], q_ref.shape[1] - 2), jnp.float32)
    q_ref[...] = jnp.concatenate([q, fill], axis=-1)


def prepare_params(params):
    """One-time packing of Critic parameters (hoisted off the per-call hot path)."""
    w1, b1, w2, b2, w3, b3, w4, b4, w5, b5, w6, b6 = [
        jnp.asarray(p, jnp.float32) for p in params
    ]
    b14 = jnp.concatenate([b1, b4], axis=0)        # (2, 400)
    b25 = jnp.concatenate([b2, b5], axis=0)        # (2, 300)
    w36 = jnp.concatenate([w3.T, w6.T], axis=0)    # (2, 300)
    b36 = jnp.concatenate([b3, b6], axis=1)        # (1, 2)
    # TODO(synk): on v6e/v7x, store w1/w4/w2/w5 in bfloat16 (f32 MXU accumulation)
    # to halve resident-weight VMEM/HBM traffic; keep f32 on v5e (no bf16 VPU path).
    return (w1, w4, b14, w2, w5, b25, w36, b36)


@functools.partial(jax.jit, static_argnames=("block_b",))
def critic_forward(x, u, packed, block_b=1024):
    """Pallas implementation of Critic.forward. Returns (q1, q2), each (B, 1)."""
    w1, w4, b14, w2, w5, b25, w36, b36 = packed

    # concat in the wrapper (trivial XLA op) -> single fused K for layer 1.
    xu = jnp.concatenate([x, u], axis=1).astype(jnp.float32)
    B, d_in = xu.shape

    # ---- adaptive batch tiling ----
    n_tiles = max(1, -(-B // block_b))      # cdiv(B, block_b)
    if B > 16:
        n_tiles = max(n_tiles, 2)           # keep both v7x TensorCores busy
    per_tile = -(-B // n_tiles)             # ceil(B / n_tiles)
    tb = ((per_tile + 7) // 8) * 8          # sublane multiple, minimal pad waste
    b_pad = n_tiles * tb
    if b_pad != B:
        xu = jnp.pad(xu, ((0, b_pad - B), (0, 0)))

    grid = (n_tiles,)
    in_specs = [
        pl.BlockSpec((tb, d_in), lambda i: (i, 0)),   # xu: streamed per batch tile
        pl.BlockSpec(w1.shape, lambda i: (0, 0)),     # weights/biases: VMEM-resident
        pl.BlockSpec(w4.shape, lambda i: (0, 0)),
        pl.BlockSpec(b14.shape, lambda i: (0, 0)),
        pl.BlockSpec(w2.shape, lambda i: (0, 0)),
        pl.BlockSpec(w5.shape, lambda i: (0, 0)),
        pl.BlockSpec(b25.shape, lambda i: (0, 0)),
        pl.BlockSpec(w36.shape, lambda i: (0, 0)),
        pl.BlockSpec(b36.shape, lambda i: (0, 0)),
    ]
    out_specs = pl.BlockSpec((tb, 128), lambda i: (i, 0))

    q = pl.pallas_call(
        _critic_kernel,
        out_shape=jax.ShapeDtypeStruct((b_pad, 128), jnp.float32),
        grid=grid,
        in_specs=in_specs,
        out_specs=out_specs,
        compiler_params=pltpu.CompilerParams(
            dimension_semantics=("parallel",),   # shard batch tiles across TCs (v7x)
            vmem_limit_bytes=32 * 1024 * 1024,   # raise v5e's 16 MiB default
        ),
    )(xu, w1, w4, b14, w2, w5, b25, w36, b36)

    q = q[:B]
    return q[:, 0:1], q[:, 1:2]


def init_critic_params(key, state_dim, action_dim):
    """Deterministic init matching nn.Linear shapes (weights stored (in, out))."""
    dims = [
        (state_dim + action_dim, 400),  # layer_1
        (400, 300),                     # layer_2
        (300, 1),                       # layer_3
        (state_dim + action_dim, 400),  # layer_4
        (400, 300),                     # layer_5
        (300, 1),                       # layer_6
    ]
    params = []
    for (fan_in, fan_out) in dims:
        key, kw, kb = jax.random.split(key, 3)
        bound = 1.0 / np.sqrt(fan_in)
        w = jax.random.uniform(kw, (fan_in, fan_out), jnp.float32, -bound, bound)
        b = jax.random.uniform(kb, (1, fan_out), jnp.float32, -bound, bound)
        params += [w, b]
    return tuple(params)


def critic_reference(x, u, params):
    """Plain-JAX reference of the PyTorch forward, for verification."""
    w1, b1, w2, b2, w3, b3, w4, b4, w5, b5, w6, b6 = params
    xu = jnp.concatenate([x, u], axis=1)
    h1 = jax.nn.relu(xu @ w1 + b1)
    h1 = jax.nn.relu(h1 @ w2 + b2)
    q1 = h1 @ w3 + b3
    h2 = jax.nn.relu(xu @ w4 + b4)
    h2 = jax.nn.relu(h2 @ w5 + b5)
    q2 = h2 @ w6 + b6
    return q1, q2


if __name__ == "__main__":
    state_dim, action_dim = 6, 2

    key = jax.random.PRNGKey(0)
    kp = jax.random.fold_in(key, 123)
    params = init_critic_params(kp, state_dim, action_dim)
    packed = prepare_params(params)          # one-time packing, reused across calls
    jax.block_until_ready(packed)

    # batch=4 exercises the single-tile (padded to 8 rows) path; batch=300 exercises
    # the multi-tile path (n_tiles=2, tb=152, 4 padded rows).
    for batch in (4, 300):
        kb = jax.random.fold_in(key, batch)
        kx, ku = jax.random.split(kb)
        x = jax.random.normal(kx, (batch, state_dim), jnp.float32)
        u = jax.random.normal(ku, (batch, action_dim), jnp.float32)

        q1, q2 = critic_forward(x, u, packed)
        jax.block_until_ready((q1, q2))

        q1_ref, q2_ref = critic_reference(x, u, params)
        np.testing.assert_allclose(np.asarray(q1), np.asarray(q1_ref), rtol=1e-4, atol=1e-4)
        np.testing.assert_allclose(np.asarray(q2), np.asarray(q2_ref), rtol=1e-4, atol=1e-4)

    print("KERNEL_OK")
</pallas_src>

<mosaic_0001>
module attributes {stable_mosaic.version = 11 : i64} {
  func.func @_critic_kernel(%arg0: i32, %arg1: memref<8x8xf32, #tpu.memory_space<vmem>>, %arg2: memref<8x400xf32, #tpu.memory_space<vmem>>, %arg3: memref<8x400xf32, #tpu.memory_space<vmem>>, %arg4: memref<2x400xf32, #tpu.memory_space<vmem>>, %arg5: memref<400x300xf32, #tpu.memory_space<vmem>>, %arg6: memref<400x300xf32, #tpu.memory_space<vmem>>, %arg7: memref<2x300xf32, #tpu.memory_space<vmem>>, %arg8: memref<2x300xf32, #tpu.memory_space<vmem>>, %arg9: memref<1x2xf32, #tpu.memory_space<vmem>>, %arg10: memref<8x128xf32, #tpu.memory_space<vmem>>) attributes {dimension_semantics = [#tpu.dimension_semantics<parallel>], iteration_bounds = array<i64: 1>, scalar_prefetch = 0 : i64, scratch_operands = 0 : i64, tpu.core_type = #tpu.core_type<tc>, window_params = [{transform_indices = @transform_0, window_bounds = array<i64: 8, 8>}, {pipeline_mode = #tpu.pipeline_mode<synchronous>, transform_indices = @transform_1, window_bounds = array<i64: 8, 400>}, {pipeline_mode = #tpu.pipeline_mode<synchronous>, transform_indices = @transform_2, window_bounds = array<i64: 8, 400>}, {pipeline_mode = #tpu.pipeline_mode<synchronous>, transform_indices = @transform_3, window_bounds = array<i64: 2, 400>}, {pipeline_mode = #tpu.pipeline_mode<synchronous>, transform_indices = @transform_4, window_bounds = array<i64: 400, 300>}, {pipeline_mode = #tpu.pipeline_mode<synchronous>, transform_indices = @transform_5, window_bounds = array<i64: 400, 300>}, {pipeline_mode = #tpu.pipeline_mode<synchronous>, transform_indices = @transform_6, window_bounds = array<i64: 2, 300>}, {pipeline_mode = #tpu.pipeline_mode<synchronous>, transform_indices = @transform_7, window_bounds = array<i64: 2, 300>}, {pipeline_mode = #tpu.pipeline_mode<synchronous>, transform_indices = @transform_8, window_bounds = array<i64: 1, 2>}, {transform_indices = @transform_9, window_bounds = array<i64: 8, 128>}]} {
    %c0 = arith.constant 0 : index
    %c0_0 = arith.constant 0 : index
    %0 = vector.load %arg1[%c0, %c0_0] : memref<8x8xf32, #tpu.memory_space<vmem>>, vector<8x8xf32>
    %1 = vector.extract_strided_slice %0 {offsets = [0, 0], sizes = [8, 1], strides = [1, 1]} : vector<8x8xf32> to vector<8x1xf32>
    %c0_1 = arith.constant 0 : index
    %c0_2 = arith.constant 0 : index
    %2 = vector.load %arg2[%c0_1, %c0_2] : memref<8x400xf32, #tpu.memory_space<vmem>>, vector<1x400xf32>
    %3 = vector.broadcast %1 : vector<8x1xf32> to vector<8x400xf32>
    %4 = vector.broadcast %2 : vector<1x400xf32> to vector<8x400xf32>
    %5 = arith.mulf %3, %4 : vector<8x400xf32>
    %6 = vector.extract_strided_slice %0 {offsets = [0, 0], sizes = [8, 1], strides = [1, 1]} : vector<8x8xf32> to vector<8x1xf32>
    %c0_3 = arith.constant 0 : index
    %c0_4 = arith.constant 0 : index
    %7 = vector.load %arg3[%c0_3, %c0_4] : memref<8x400xf32, #tpu.memory_space<vmem>>, vector<1x400xf32>
    %8 = vector.broadcast %6 : vector<8x1xf32> to vector<8x400xf32>
    %9 = vector.broadcast %7 : vector<1x400xf32> to vector<8x400xf32>
    %10 = arith.mulf %8, %9 : vector<8x400xf32>
    %11 = vector.extract_strided_slice %0 {offsets = [0, 1], sizes = [8, 1], strides = [1, 1]} : vector<8x8xf32> to vector<8x1xf32>
    %c1 = arith.constant 1 : index
    %c0_5 = arith.constant 0 : index
    %12 = vector.load %arg2[%c1, %c0_5] : memref<8x400xf32, #tpu.memory_space<vmem>>, vector<1x400xf32>
    %13 = vector.broadcast %11 : vector<8x1xf32> to vector<8x400xf32>
    %14 = vector.broadcast %12 : vector<1x400xf32> to vector<8x400xf32>
    %15 = arith.mulf %13, %14 : vector<8x400xf32>
    %16 = arith.addf %5, %15 : vector<8x400xf32>
    %17 = vector.extract_strided_slice %0 {offsets = [0, 1], sizes = [8, 1], strides = [1, 1]} : vector<8x8xf32> to vector<8x1xf32>
    %c1_6 = arith.constant 1 : index
    %c0_7 = arith.constant 0 : index
    %18 = vector.load %arg3[%c1_6, %c0_7] : memref<8x400xf32, #tpu.memory_space<vmem>>, vector<1x400xf32>
    %19 = vector.broadcast %17 : vector<8x1xf32> to vector<8x400xf32>
    %20 = vector.broadcast %18 : vector<1x400xf32> to vector<8x400xf32>
    %21 = arith.mulf %19, %20 : vector<8x400xf32>
    %22 = arith.addf %10, %21 : vector<8x400xf32>
    %23 = vector.extract_strided_slice %0 {offsets = [0, 2], sizes = [8, 1], strides = [1, 1]} : vector<8x8xf32> to vector<8x1xf32>
    %c2 = arith.constant 2 : index
    %c0_8 = arith.constant 0 : index
    %24 = vector.load %arg2[%c2, %c0_8] : memref<8x400xf32, #tpu.memory_space<vmem>>, vector<1x400xf32>
    %25 = vector.broadcast %23 : vector<8x1xf32> to vector<8x400xf32>
    %26 = vector.broadcast %24 : vector<1x400xf32> to vector<8x400xf32>
    %27 = arith.mulf %25, %26 : vector<8x400xf32>
    %28 = arith.addf %16, %27 : vector<8x400xf32>
    %29 = vector.extract_strided_slice %0 {offsets = [0, 2], sizes = [8, 1], strides = [1, 1]} : vector<8x8xf32> to vector<8x1xf32>
    %c2_9 = arith.constant 2 : index
    %c0_10 = arith.constant 0 : index
    %30 = vector.load %arg3[%c2_9, %c0_10] : memref<8x400xf32, #tpu.memory_space<vmem>>, vector<1x400xf32>
    %31 = vector.broadcast %29 : vector<8x1xf32> to vector<8x400xf32>
    %32 = vector.broadcast %30 : vector<1x400xf32> to vector<8x400xf32>
    %33 = arith.mulf %31, %32 : vector<8x400xf32>
    %34 = arith.addf %22, %33 : vector<8x400xf32>
    %35 = vector.extract_strided_slice %0 {offsets = [0, 3], sizes = [8, 1], strides = [1, 1]} : vector<8x8xf32> to vector<8x1xf32>
    %c3 = arith.constant 3 : index
    %c0_11 = arith.constant 0 : index
    %36 = vector.load %arg2[%c3, %c0_11] : memref<8x400xf32, #tpu.memory_space<vmem>>, vector<1x400xf32>
    %37 = vector.broadcast %35 : vector<8x1xf32> to vector<8x400xf32>
    %38 = vector.broadcast %36 : vector<1x400xf32> to vector<8x400xf32>
    %39 = arith.mulf %37, %38 : vector<8x400xf32>
    %40 = arith.addf %28, %39 : vector<8x400xf32>
    %41 = vector.extract_strided_slice %0 {offsets = [0, 3], sizes = [8, 1], strides = [1, 1]} : vector<8x8xf32> to vector<8x1xf32>
    %c3_12 = arith.constant 3 : index
    %c0_13 = arith.constant 0 : index
    %42 = vector.load %arg3[%c3_12, %c0_13] : memref<8x400xf32, #tpu.memory_space<vmem>>, vector<1x400xf32>
    %43 = vector.broadcast %41 : vector<8x1xf32> to vector<8x400xf32>
    %44 = vector.broadcast %42 : vector<1x400xf32> to vector<8x400xf32>
    %45 = arith.mulf %43, %44 : vector<8x400xf32>
    %46 = arith.addf %34, %45 : vector<8x400xf32>
    %47 = vector.extract_strided_slice %0 {offsets = [0, 4], sizes = [8, 1], strides = [1, 1]} : vector<8x8xf32> to vector<8x1xf32>
    %c4 = arith.constant 4 : index
    %c0_14 = arith.constant 0 : index
    %48 = vector.load %arg2[%c4, %c0_14] : memref<8x400xf32, #tpu.memory_space<vmem>>, vector<1x400xf32>
    %49 = vector.broadcast %47 : vector<8x1xf32> to vector<8x400xf32>
    %50 = vector.broadcast %48 : vector<1x400xf32> to vector<8x400xf32>
    %51 = arith.mulf %49, %50 : vector<8x400xf32>
    %52 = arith.addf %40, %51 : vector<8x400xf32>
    %53 = vector.extract_strided_slice %0 {offsets = [0, 4], sizes = [8, 1], strides = [1, 1]} : vector<8x8xf32> to vector<8x1xf32>
    %c4_15 = arith.constant 4 : index
    %c0_16 = arith.constant 0 : index
    %54 = vector.load %arg3[%c4_15, %c0_16] : memref<8x400xf32, #tpu.memory_space<vmem>>, vector<1x400xf32>
    %55 = vector.broadcast %53 : vector<8x1xf32> to vector<8x400xf32>
    %56 = vector.broadcast %54 : vector<1x400xf32> to vector<8x400xf32>
    %57 = arith.mulf %55, %56 : vector<8x400xf32>
    %58 = arith.addf %46, %57 : vector<8x400xf32>
    %59 = vector.extract_strided_slice %0 {offsets = [0, 5], sizes = [8, 1], strides = [1, 1]} : vector<8x8xf32> to vector<8x1xf32>
    %c5 = arith.constant 5 : index
    %c0_17 = arith.constant 0 : index
    %60 = vector.load %arg2[%c5, %c0_17] : memref<8x400xf32, #tpu.memory_space<vmem>>, vector<1x400xf32>
    %61 = vector.broadcast %59 : vector<8x1xf32> to vector<8x400xf32>
    %62 = vector.broadcast %60 : vector<1x400xf32> to vector<8x400xf32>
    %63 = arith.mulf %61, %62 : vector<8x400xf32>
    %64 = arith.addf %52, %63 : vector<8x400xf32>
    %65 = vector.extract_strided_slice %0 {offsets = [0, 5], sizes = [8, 1], strides = [1, 1]} : vector<8x8xf32> to vector<8x1xf32>
    %c5_18 = arith.constant 5 : index
    %c0_19 = arith.constant 0 : index
    %66 = vector.load %arg3[%c5_18, %c0_19] : memref<8x400xf32, #tpu.memory_space<vmem>>, vector<1x400xf32>
    %67 = vector.broadcast %65 : vector<8x1xf32> to vector<8x400xf32>
    %68 = vector.broadcast %66 : vector<1x400xf32> to vector<8x400xf32>
    %69 = arith.mulf %67, %68 : vector<8x400xf32>
    %70 = arith.addf %58, %69 : vector<8x400xf32>
    %71 = vector.extract_strided_slice %0 {offsets = [0, 6], sizes = [8, 1], strides = [1, 1]} : vector<8x8xf32> to vector<8x1xf32>
    %c6 = arith.constant 6 : index
    %c0_20 = arith.constant 0 : index
    %72 = vector.load %arg2[%c6, %c0_20] : memref<8x400xf32, #tpu.memory_space<vmem>>, vector<1x400xf32>
    %73 = vector.broadcast %71 : vector<8x1xf32> to vector<8x400xf32>
    %74 = vector.broadcast %72 : vector<1x400xf32> to vector<8x400xf32>
    %75 = arith.mulf %73, %74 : vector<8x400xf32>
    %76 = arith.addf %64, %75 : vector<8x400xf32>
    %77 = vector.extract_strided_slice %0 {offsets = [0, 6], sizes = [8, 1], strides = [1, 1]} : vector<8x8xf32> to vector<8x1xf32>
    %c6_21 = arith.constant 6 : index
    %c0_22 = arith.constant 0 : index
    %78 = vector.load %arg3[%c6_21, %c0_22] : memref<8x400xf32, #tpu.memory_space<vmem>>, vector<1x400xf32>
    %79 = vector.broadcast %77 : vector<8x1xf32> to vector<8x400xf32>
    %80 = vector.broadcast %78 : vector<1x400xf32> to vector<8x400xf32>
    %81 = arith.mulf %79, %80 : vector<8x400xf32>
    %82 = arith.addf %70, %81 : vector<8x400xf32>
    %83 = vector.extract_strided_slice %0 {offsets = [0, 7], sizes = [8, 1], strides = [1, 1]} : vector<8x8xf32> to vector<8x1xf32>
    %c7 = arith.constant 7 : index
    %c0_23 = arith.constant 0 : index
    %84 = vector.load %arg2[%c7, %c0_23] : memref<8x400xf32, #tpu.memory_space<vmem>>, vector<1x400xf32>
    %85 = vector.broadcast %83 : vector<8x1xf32> to vector<8x400xf32>
    %86 = vector.broadcast %84 : vector<1x400xf32> to vector<8x400xf32>
    %87 = arith.mulf %85, %86 : vector<8x400xf32>
    %88 = arith.addf %76, %87 : vector<8x400xf32>
    %89 = vector.extract_strided_slice %0 {offsets = [0, 7], sizes = [8, 1], strides = [1, 1]} : vector<8x8xf32> to vector<8x1xf32>
    %c7_24 = arith.constant 7 : index
    %c0_25 = arith.constant 0 : index
    %90 = vector.load %arg3[%c7_24, %c0_25] : memref<8x400xf32, #tpu.memory_space<vmem>>, vector<1x400xf32>
    %91 = vector.broadcast %89 : vector<8x1xf32> to vector<8x400xf32>
    %92 = vector.broadcast %90 : vector<1x400xf32> to vector<8x400xf32>
    %93 = arith.mulf %91, %92 : vector<8x400xf32>
    %94 = arith.addf %82, %93 : vector<8x400xf32>
    %c0_26 = arith.constant 0 : index
    %c0_27 = arith.constant 0 : index
    %95 = vector.load %arg4[%c0_26, %c0_27] : memref<2x400xf32, #tpu.memory_space<vmem>>, vector<1x400xf32>
    %96 = vector.broadcast %95 : vector<1x400xf32> to vector<8x400xf32>
    %97 = arith.addf %88, %96 : vector<8x400xf32>
    %cst = arith.constant 0.000000e+00 : f32
    %98 = vector.broadcast %cst : f32 to vector<8x400xf32>
    %99 = arith.maximumf %97, %98 : vector<8x400xf32>
    %c1_28 = arith.constant 1 : index
    %c0_29 = arith.constant 0 : index
    %100 = vector.load %arg4[%c1_28, %c0_29] : memref<2x400xf32, #tpu.memory_space<vmem>>, vector<1x400xf32>
    %101 = vector.broadcast %100 : vector<1x400xf32> to vector<8x400xf32>
    %102 = arith.addf %94, %101 : vector<8x400xf32>
    %cst_30 = arith.constant 0.000000e+00 : f32
    %103 = vector.broadcast %cst_30 : f32 to vector<8x400xf32>
    %104 = arith.maximumf %102, %103 : vector<8x400xf32>
    %c0_31 = arith.constant 0 : index
    %c0_32 = arith.constant 0 : index
    %105 = vector.load %arg5[%c0_31, %c0_32] : memref<400x300xf32, #tpu.memory_space<vmem>>, vector<400x300xf32>
    %cst_33 = arith.constant dense<0.000000e+00> : vector<8x300xf32>
    %106 = tpu.matmul %99, %105, %cst_33 {dimension_numbers = #tpu.dot_dimension_numbers<[1], [0], [0], [1], [0, 0, 1, 1], [], []>} : vector<8x400xf32>, vector<400x300xf32>, vector<8x300xf32> -> vector<8x300xf32>
    %c0_34 = arith.constant 0 : index
    %c0_35 = arith.constant 0 : index
    %107 = vector.load %arg7[%c0_34, %c0_35] : memref<2x300xf32, #tpu.memory_space<vmem>>, vector<1x300xf32>
    %108 = vector.broadcast %107 : vector<1x300xf32> to vector<8x300xf32>
    %109 = arith.addf %106, %108 : vector<8x300xf32>
    %cst_36 = arith.constant 0.000000e+00 : f32
    %110 = vector.broadcast %cst_36 : f32 to vector<8x300xf32>
    %111 = arith.maximumf %109, %110 : vector<8x300xf32>
    %c0_37 = arith.constant 0 : index
    %c0_38 = arith.constant 0 : index
    %112 = vector.load %arg6[%c0_37, %c0_38] : memref<400x300xf32, #tpu.memory_space<vmem>>, vector<400x300xf32>
    %cst_39 = arith.constant dense<0.000000e+00> : vector<8x300xf32>
    %113 = tpu.matmul %104, %112, %cst_39 {dimension_numbers = #tpu.dot_dimension_numbers<[1], [0], [0], [1], [0, 0, 1, 1], [], []>} : vector<8x400xf32>, vector<400x300xf32>, vector<8x300xf32> -> vector<8x300xf32>
    %c1_40 = arith.constant 1 : index
    %c0_41 = arith.constant 0 : index
    %114 = vector.load %arg7[%c1_40, %c0_41] : memref<2x300xf32, #tpu.memory_space<vmem>>, vector<1x300xf32>
    %115 = vector.broadcast %114 : vector<1x300xf32> to vector<8x300xf32>
    %116 = arith.addf %113, %115 : vector<8x300xf32>
    %cst_42 = arith.constant 0.000000e+00 : f32
    %117 = vector.broadcast %cst_42 : f32 to vector<8x300xf32>
    %118 = arith.maximumf %116, %117 : vector<8x300xf32>
    %c0_43 = arith.constant 0 : index
    %c0_44 = arith.constant 0 : index
    %119 = vector.load %arg8[%c0_43, %c0_44] : memref<2x300xf32, #tpu.memory_space<vmem>>, vector<1x300xf32>
    %120 = vector.broadcast %119 : vector<1x300xf32> to vector<8x300xf32>
    %121 = arith.mulf %111, %120 : vector<8x300xf32>
    %cst_45 = arith.constant dense<0.000000e+00> : vector<8xf32>
    %122 = vector.multi_reduction <add>, %121, %cst_45 [1] : vector<8x300xf32> to vector<8xf32>
    %123 = vector.shape_cast %122 : vector<8xf32> to vector<8x1xf32>
    %c1_46 = arith.constant 1 : index
    %c0_47 = arith.constant 0 : index
    %124 = vector.load %arg8[%c1_46, %c0_47] : memref<2x300xf32, #tpu.memory_space<vmem>>, vector<1x300xf32>
    %125 = vector.broadcast %124 : vector<1x300xf32> to vector<8x300xf32>
    %126 = arith.mulf %118, %125 : vector<8x300xf32>
    %cst_48 = arith.constant dense<0.000000e+00> : vector<8xf32>
    %127 = vector.multi_reduction <add>, %126, %cst_48 [1] : vector<8x300xf32> to vector<8xf32>
    %128 = vector.shape_cast %127 : vector<8xf32> to vector<8x1xf32>
    %129 = tpu.concatenate %123, %128 in 1 : vector<8x1xf32>, vector<8x1xf32> -> vector<8x2xf32>
    %c0_49 = arith.constant 0 : index
    %c0_50 = arith.constant 0 : index
    %130 = vector.load %arg9[%c0_49, %c0_50] : memref<1x2xf32, #tpu.memory_space<vmem>>, vector<1x2xf32>
    %131 = vector.broadcast %130 : vector<1x2xf32> to vector<8x2xf32>
    %132 = arith.addf %129, %131 : vector<8x2xf32>
    %cst_51 = arith.constant 0.000000e+00 : f32
    %133 = vector.broadcast %cst_51 : f32 to vector<8x126xf32>
    %134 = tpu.concatenate %132, %133 in 1 : vector<8x2xf32>, vector<8x126xf32> -> vector<8x128xf32>
    %c0_52 = arith.constant 0 : index
    %c0_53 = arith.constant 0 : index
    %135 = vector.load %arg10[%c0_52, %c0_53] : memref<8x128xf32, #tpu.memory_space<vmem>>, vector<8x128xf32>
    tpu.vector_store %arg10[%c0_52, %c0_53], %134 {strides = array<i32>} : memref<8x128xf32, #tpu.memory_space<vmem>>, vector<8x128xf32>,
    return
  }
  func.func @transform_0(%arg0: i32) -> (i32, i32) {
    %c0_i32 = arith.constant 0 : i32
    %c0_i32_0 = arith.constant 0 : i32
    return %arg0, %c0_i32 : i32, i32
  }
  func.func @transform_1(%arg0: i32) -> (i32, i32) {
    %c0_i32 = arith.constant 0 : i32
    %c0_i32_0 = arith.constant 0 : i32
    %c0_i32_1 = arith.constant 0 : i32
    return %c0_i32, %c0_i32_0 : i32, i32
  }
  func.func @transform_2(%arg0: i32) -> (i32, i32) {
    %c0_i32 = arith.constant 0 : i32
    %c0_i32_0 = arith.constant 0 : i32
    %c0_i32_1 = arith.constant 0 : i32
    return %c0_i32, %c0_i32_0 : i32, i32
  }
  func.func @transform_3(%arg0: i32) -> (i32, i32) {
    %c0_i32 = arith.constant 0 : i32
    %c0_i32_0 = arith.constant 0 : i32
    %c0_i32_1 = arith.constant 0 : i32
    return %c0_i32, %c0_i32_0 : i32, i32
  }
  func.func @transform_4(%arg0: i32) -> (i32, i32) {
    %c0_i32 = arith.constant 0 : i32
    %c0_i32_0 = arith.constant 0 : i32
    %c0_i32_1 = arith.constant 0 : i32
    return %c0_i32, %c0_i32_0 : i32, i32
  }
  func.func @transform_5(%arg0: i32) -> (i32, i32) {
    %c0_i32 = arith.constant 0 : i32
    %c0_i32_0 = arith.constant 0 : i32
    %c0_i32_1 = arith.constant 0 : i32
    return %c0_i32, %c0_i32_0 : i32, i32
  }
  func.func @transform_6(%arg0: i32) -> (i32, i32) {
    %c0_i32 = arith.constant 0 : i32
    %c0_i32_0 = arith.constant 0 : i32
    %c0_i32_1 = arith.constant 0 : i32
    return %c0_i32, %c0_i32_0 : i32, i32
  }
  func.func @transform_7(%arg0: i32) -> (i32, i32) {
    %c0_i32 = arith.constant 0 : i32
    %c0_i32_0 = arith.constant 0 : i32
    %c0_i32_1 = arith.constant 0 : i32
    return %c0_i32, %c0_i32_0 : i32, i32
  }
  func.func @transform_8(%arg0: i32) -> (i32, i32) {
    %c0_i32 = arith.constant 0 : i32
    %c0_i32_0 = arith.constant 0 : i32
    %c0_i32_1 = arith.constant 0 : i32
    return %c0_i32, %c0_i32_0 : i32, i32
  }
  func.func @transform_9(%arg0: i32) -> (i32, i32) {
    %c0_i32 = arith.constant 0 : i32
    %c0_i32_0 = arith.constant 0 : i32
    return %arg0, %c0_i32 : i32, i32
  }
}

</mosaic_0001>

<llo_original>
// kernel: critic_forward.1
$region0: #{critic_forward.1}
  #allocation0 [shape = 'u32[]', space=smem, size = 0x4, offset = 0x4, fixed_abs, tag = 'smem constant byte address 0x4 - core index']
  #allocation1 [shape = 'u32[72,128]{1,0:T(1,128)}', space=vmem, size = 0x9000, scoped, tag = 'internal scratch']
  %s0 = inlined_call_operand.vmem [shape: f32[8,8], index: 0, kind: input, shape index: {}]
  %s1 = inlined_call_operand.hbm [shape: f32[8,400], index: 1, kind: input, shape index: {}]
  %s2 = inlined_call_operand.hbm [shape: f32[8,400], index: 2, kind: input, shape index: {}]
  %s3 = inlined_call_operand.vmem [shape: f32[2,400], index: 3, kind: input, shape index: {}]
  %s4 = inlined_call_operand.hbm [shape: f32[400,300], index: 4, kind: input, shape index: {}]
  %s5 = inlined_call_operand.hbm [shape: f32[400,300], index: 5, kind: input, shape index: {}]
  %s6 = inlined_call_operand.vmem [shape: f32[2,300], index: 6, kind: input, shape index: {}]
  %s7 = inlined_call_operand.vmem [shape: f32[2,300], index: 7, kind: input, shape index: {}]
  %s8 = inlined_call_operand.vmem [shape: f32[1,2], index: 8, kind: input, shape index: {}]
  %s9 = inlined_call_operand.vmem [shape: f32[8,128], index: 9, kind: output, shape index: {}]
  %s10 = sld [smem:[#allocation0]]
  $region62: #{critic_forward.1} parent=0
    _
  %s12 = ssub.s32 1, %s10
  %s13 = scalar_select 0, %s12, %s10
  $region1: #{critic_forward.1} parent=0
    #allocation2 [shape = 'u8[16384]{0}', space=vmem, size = 0x4000, scoped, tag = 'input window, operand 1, single buffered']
    #allocation3 [shape = 's32[1]{0}', space=sflag, size = 0x4, scoped, tag = 'scoped memory for critic_forward.1']
    #allocation4 [shape = 'u8[16384]{0}', space=vmem, size = 0x4000, scoped, tag = 'input window, operand 2, single buffered']
    #allocation5 [shape = 's32[1]{0}', space=sflag, size = 0x4, scoped, tag = 'scoped memory for critic_forward.1']
    #allocation6 [shape = 'u8[614400]{0}', space=vmem, size = 0x96000, scoped, tag = 'input window, operand 4, single buffered']
    #allocation7 [shape = 'u8[614400]{0}', space=vmem, size = 0x96000, scoped, tag = 'input window, operand 5, single buffered']
    #allocation8 [shape = 's32[1]{0}', space=sflag, size = 0x4, scoped, tag = 'scoped memory for critic_forward.1']
    %14 = vsyncpa [#allocation3], 0
    %15 = vsyncpa [#allocation5], 0
    %16 = vsyncpa [#allocation8], 0
    // Predicated region
    $region2: #{critic_forward.1} parent=1 // pred_check
      _
    $region3: #{critic_forward.1} parent=1 // pred_check_branch
      %18 = sbr.rel (0) target = $region5
    $region4: #{critic_forward.1} parent=1 // pred_region
      _
    $region5: #{critic_forward.1} parent=1 // pred_fallthru
      _
    // Predicated region
    $region6: #{critic_forward.1} parent=1 // pred_check
      _
    $region7: #{critic_forward.1} parent=1 // pred_check_branch
      %20 = sbr.rel (0) target = $region9
    $region8: #{critic_forward.1} parent=1 // pred_region
      %22 = vsyncadd [#allocation3], 0
      %s24 = sshll.u32 %s1, 4
      %s25 = int_to_ptr.hbm [resolvable:$true] %s24
      %s26 = sshll.u32 [#allocation2], 4
      %s27 = int_to_ptr.vmem [resolvable:$true] %s26
      %29 = dma.hbm_to_vmem [thread:$0]  %s25, 512, %s27, [#allocation3]
    $region9: #{critic_forward.1} parent=1 // pred_fallthru
      _
    // Predicated region
    $region10: #{critic_forward.1} parent=1 // pred_check
      _
    $region11: #{critic_forward.1} parent=1 // pred_check_branch
      %31 = sbr.rel (0) target = $region13
    $region12: #{critic_forward.1} parent=1 // pred_region
      %33 = vsyncadd [#allocation5], 0
      %s35 = sshll.u32 %s2, 4
      %s36 = int_to_ptr.hbm [resolvable:$true] %s35
      %s37 = sshll.u32 [#allocation4], 4
      %s38 = int_to_ptr.vmem [resolvable:$true] %s37
      %40 = dma.hbm_to_vmem [thread:$0]  %s36, 512, %s38, [#allocation5]
    $region13: #{critic_forward.1} parent=1 // pred_fallthru
      _
    // Predicated region
    $region14: #{critic_forward.1} parent=1 // pred_check
      _
    $region15: #{critic_forward.1} parent=1 // pred_check_branch
      %42 = sbr.rel (0) target = $region17
    $region16: #{critic_forward.1} parent=1 // pred_region
      _
    $region17: #{critic_forward.1} parent=1 // pred_fallthru
      _
    // Predicated region
    $region18: #{critic_forward.1} parent=1 // pred_check
      _
    $region19: #{critic_forward.1} parent=1 // pred_check_branch
      %44 = sbr.rel (0) target = $region21
    $region20: #{critic_forward.1} parent=1 // pred_region
      %46 = vsyncadd [#allocation5], 0
      %s47 = sshll.u32 %s4, 4
      %s48 = int_to_ptr.hbm [resolvable:$true] %s47
      %s49 = sshll.u32 [#allocation6], 4
      %s50 = int_to_ptr.vmem [resolvable:$true] %s49
      %55 = dma.hbm_to_vmem [thread:$0]  %s48, 19200, %s50, [#allocation5], 384, 384, 24
    $region21: #{critic_forward.1} parent=1 // pred_fallthru
      _
    // Predicated region
    $region22: #{critic_forward.1} parent=1 // pred_check
      _
    $region23: #{critic_forward.1} parent=1 // pred_check_branch
      %57 = sbr.rel (0) target = $region25
    $region24: #{critic_forward.1} parent=1 // pred_region
      %59 = vsyncadd [#allocation8], 0
      %s60 = sshll.u32 %s5, 4
      %s61 = int_to_ptr.hbm [resolvable:$true] %s60
      %s62 = sshll.u32 [#allocation7], 4
      %s63 = int_to_ptr.vmem [resolvable:$true] %s62
      %68 = dma.hbm_to_vmem [thread:$0]  %s61, 19200, %s63, [#allocation8], 384, 384, 24
    $region25: #{critic_forward.1} parent=1 // pred_fallthru
      _
    // Predicated region
    $region26: #{critic_forward.1} parent=1 // pred_check
      _
    $region27: #{critic_forward.1} parent=1 // pred_check_branch
      %70 = sbr.rel (0) target = $region29
    $region28: #{critic_forward.1} parent=1 // pred_region
      _
    $region29: #{critic_forward.1} parent=1 // pred_fallthru
      _
    // Predicated region
    $region30: #{critic_forward.1} parent=1 // pred_check
      _
    $region31: #{critic_forward.1} parent=1 // pred_check_branch
      %72 = sbr.rel (0) target = $region33
    $region32: #{critic_forward.1} parent=1 // pred_region
      _
    $region33: #{critic_forward.1} parent=1 // pred_fallthru
      _
    // Predicated region
    $region34: #{critic_forward.1} parent=1 // pred_check
      _
    $region35: #{critic_forward.1} parent=1 // pred_check_branch
      %74 = sbr.rel (0) target = $region37
    $region36: #{critic_forward.1} parent=1 // pred_region
      _
    $region37: #{critic_forward.1} parent=1 // pred_fallthru
      _
    // Predicated region
    $region38: #{critic_forward.1} parent=1 // pred_check
      _
    $region39: #{critic_forward.1} parent=1 // pred_check_branch
      %76 = sbr.rel (0) target = $region41
    $region40: #{critic_forward.1} parent=1 // pred_region
      %78 = dma.done [#allocation3], 512
    $region41: #{critic_forward.1} parent=1 // pred_fallthru
      _
    // Predicated region
    $region42: #{critic_forward.1} parent=1 // pred_check
      _
    $region43: #{critic_forward.1} parent=1 // pred_check_branch
      %80 = sbr.rel (0) target = $region45
    $region44: #{critic_forward.1} parent=1 // pred_region
      %82 = dma.done [#allocation5], 512
    $region45: #{critic_forward.1} parent=1 // pred_fallthru
      _
    // Predicated region
    $region46: #{critic_forward.1} parent=1 // pred_check
      _
    $region47: #{critic_forward.1} parent=1 // pred_check_branch
      %84 = sbr.rel (0) target = $region49
    $region48: #{critic_forward.1} parent=1 // pred_region
      %86 = dma.done [#allocation5], 19200
    $region49: #{critic_forward.1} parent=1 // pred_fallthru
      _
    // Predicated region
    $region50: #{critic_forward.1} parent=1 // pred_check
      _
    $region51: #{critic_forward.1} parent=1 // pred_check_branch
      %88 = sbr.rel (0) target = $region53
    $region52: #{critic_forward.1} parent=1 // pred_region
      %90 = dma.done [#allocation8], 19200
    $region53: #{critic_forward.1} parent=1 // pred_fallthru
      _
    %v91 = vld [vmem:[%s0] sm:$0xff]
    %v92 = vld [vmem:[#allocation2] ss:$8 sm:$0xf]
    %94 = vset.pattern.permute.xlu0 0
    %95 = vperm.xlu0 %94, %v91
    %v96 = vpop.permute.xlu0 %95
    %v99 = vperm.slane %v92, 0
    %v100 = vperm.slane %v92, 1
    %v101 = vperm.slane %v92, 2
    %v102 = vperm.slane %v92, 3
    %v107 = vmul.f32 %v96, %v99
    %v108 = vmul.f32 %v96, %v100
    %v109 = vmul.f32 %v96, %v101
    %v110 = vmul.f32 %v96, %v102
    %v111 = vld [vmem:[#allocation4] ss:$8 sm:$0xf]
    %v113 = vperm.slane %v111, 0
    %v114 = vperm.slane %v111, 1
    %v115 = vperm.slane %v111, 2
    %v116 = vperm.slane %v111, 3
    %v121 = vmul.f32 %v96, %v113
    %v122 = vmul.f32 %v96, %v114
    %v123 = vmul.f32 %v96, %v115
    %v124 = vmul.f32 %v96, %v116
    %s125 = scalar_lea.vmem [#allocation2], 1
    %v126 = vld [vmem:[%s125] ss:$8 sm:$0xf]
    %127 = vset.pattern.permute.xlu0 1
    %128 = vperm.xlu0 %127, %v91
    %v129 = vpop.permute.xlu0 %128
    %v132 = vperm.slane %v126, 0
    %v133 = vperm.slane %v126, 1
    %v134 = vperm.slane %v126, 2
    %v135 = vperm.slane %v126, 3
    %v140 = vmul.f32 %v129, %v132
    %v141 = vmul.f32 %v129, %v133
    %v142 = vmul.f32 %v129, %v134
    %v143 = vmul.f32 %v129, %v135
    %v144 = vadd.f32 %v107, %v140
    %v145 = vadd.f32 %v108, %v141
    %v146 = vadd.f32 %v109, %v142
    %v147 = vadd.f32 %v110, %v143
    %s148 = scalar_lea.vmem [#allocation4], 1
    %v149 = vld [vmem:[%s148] ss:$8 sm:$0xf]
    %v151 = vperm.slane %v149, 0
    %v152 = vperm.slane %v149, 1
    %v153 = vperm.slane %v149, 2
    %v154 = vperm.slane %v149, 3
    %v159 = vmul.f32 %v129, %v151
    %v160 = vmul.f32 %v129, %v152
    %v161 = vmul.f32 %v129, %v153
    %v162 = vmul.f32 %v129, %v154
    %v163 = vadd.f32 %v121, %v159
    %v164 = vadd.f32 %v122, %v160
    %v165 = vadd.f32 %v123, %v161
    %v166 = vadd.f32 %v124, %v162
    %s167 = scalar_lea.vmem [#allocation2], 2
    %v168 = vld [vmem:[%s167] ss:$8 sm:$0xf]
    %169 = vset.pattern.permute.xlu0 2
    %170 = vperm.xlu0 %169, %v91
    %v171 = vpop.permute.xlu0 %170
    %v174 = vperm.slane %v168, 0
    %v175 = vperm.slane %v168, 1
    %v176 = vperm.slane %v168, 2
    %v177 = vperm.slane %v168, 3
    %v182 = vmul.f32 %v171, %v174
    %v183 = vmul.f32 %v171, %v175
    %v184 = vmul.f32 %v171, %v176
    %v185 = vmul.f32 %v171, %v177
    %v186 = vadd.f32 %v144, %v182
    %v187 = vadd.f32 %v145, %v183
    %v188 = vadd.f32 %v146, %v184
    %v189 = vadd.f32 %v147, %v185
    %s190 = scalar_lea.vmem [#allocation4], 2
    %v191 = vld [vmem:[%s190] ss:$8 sm:$0xf]
    %v193 = vperm.slane %v191, 0
    %v194 = vperm.slane %v191, 1
    %v195 = vperm.slane %v191, 2
    %v196 = vperm.slane %v191, 3
    %v201 = vmul.f32 %v171, %v193
    %v202 = vmul.f32 %v171, %v194
    %v203 = vmul.f32 %v171, %v195
    %v204 = vmul.f32 %v171, %v196
    %v205 = vadd.f32 %v163, %v201
    %v206 = vadd.f32 %v164, %v202
    %v207 = vadd.f32 %v165, %v203
    %v208 = vadd.f32 %v166, %v204
    %s209 = scalar_lea.vmem [#allocation2], 3
    %v210 = vld [vmem:[%s209] ss:$8 sm:$0xf]
    %211 = vset.pattern.permute.xlu0 3
    %212 = vperm.xlu0 %211, %v91
    %v213 = vpop.permute.xlu0 %212
    %v216 = vperm.slane %v210, 0
    %v217 = vperm.slane %v210, 1
    %v218 = vperm.slane %v210, 2
    %v219 = vperm.slane %v210, 3
    %v224 = vmul.f32 %v213, %v216
    %v225 = vmul.f32 %v213, %v217
    %v226 = vmul.f32 %v213, %v218
    %v227 = vmul.f32 %v213, %v219
    %v228 = vadd.f32 %v186, %v224
    %v229 = vadd.f32 %v187, %v225
    %v230 = vadd.f32 %v188, %v226
    %v231 = vadd.f32 %v189, %v227
    %s232 = scalar_lea.vmem [#allocation4], 3
    %v233 = vld [vmem:[%s232] ss:$8 sm:$0xf]
    %v235 = vperm.slane %v233, 0
    %v236 = vperm.slane %v233, 1
    %v237 = vperm.slane %v233, 2
    %v238 = vperm.slane %v233, 3
    %v243 = vmul.f32 %v213, %v235
    %v244 = vmul.f32 %v213, %v236
    %v245 = vmul.f32 %v213, %v237
    %v246 = vmul.f32 %v213, %v238
    %v247 = vadd.f32 %v205, %v243
    %v248 = vadd.f32 %v206, %v244
    %v249 = vadd.f32 %v207, %v245
    %v250 = vadd.f32 %v208, %v246
    %s251 = scalar_lea.vmem [#allocation2], 4
    %v252 = vld [vmem:[%s251] ss:$8 sm:$0xf]
    %253 = vset.pattern.permute.xlu0 4
    %254 = vperm.xlu0 %253, %v91
    %v255 = vpop.permute.xlu0 %254
    %v258 = vperm.slane %v252, 0
    %v259 = vperm.slane %v252, 1
    %v260 = vperm.slane %v252, 2
    %v261 = vperm.slane %v252, 3
    %v266 = vmul.f32 %v255, %v258
    %v267 = vmul.f32 %v255, %v259
    %v268 = vmul.f32 %v255, %v260
    %v269 = vmul.f32 %v255, %v261
    %v270 = vadd.f32 %v228, %v266
    %v271 = vadd.f32 %v229, %v267
    %v272 = vadd.f32 %v230, %v268
    %v273 = vadd.f32 %v231, %v269
    %s274 = scalar_lea.vmem [#allocation4], 4
    %v275 = vld [vmem:[%s274] ss:$8 sm:$0xf]
    %v277 = vperm.slane %v275, 0
    %v278 = vperm.slane %v275, 1
    %v279 = vperm.slane %v275, 2
    %v280 = vperm.slane %v275, 3
    %v285 = vmul.f32 %v255, %v277
    %v286 = vmul.f32 %v255, %v278
    %v287 = vmul.f32 %v255, %v279
    %v288 = vmul.f32 %v255, %v280
    %v289 = vadd.f32 %v247, %v285
    %v290 = vadd.f32 %v248, %v286
    %v291 = vadd.f32 %v249, %v287
    %v292 = vadd.f32 %v250, %v288
    %s293 = scalar_lea.vmem [#allocation2], 5
    %v294 = vld [vmem:[%s293] ss:$8 sm:$0xf]
    %295 = vset.pattern.permute.xlu0 5
    %296 = vperm.xlu0 %295, %v91
    %v297 = vpop.permute.xlu0 %296
    %v300 = vperm.slane %v294, 0
    %v301 = vperm.slane %v294, 1
    %v302 = vperm.slane %v294, 2
    %v303 = vperm.slane %v294, 3
    %v308 = vmul.f32 %v297, %v300
    %v309 = vmul.f32 %v297, %v301
    %v310 = vmul.f32 %v297, %v302
    %v311 = vmul.f32 %v297, %v303
    %v312 = vadd.f32 %v270, %v308
    %v313 = vadd.f32 %v271, %v309
    %v314 = vadd.f32 %v272, %v310
    %v315 = vadd.f32 %v273, %v311
    %s316 = scalar_lea.vmem [#allocation4], 5
    %v317 = vld [vmem:[%s316] ss:$8 sm:$0xf]
    %v319 = vperm.slane %v317, 0
    %v320 = vperm.slane %v317, 1
    %v321 = vperm.slane %v317, 2
    %v322 = vperm.slane %v317, 3
    %v327 = vmul.f32 %v297, %v319
    %v328 = vmul.f32 %v297, %v320
    %v329 = vmul.f32 %v297, %v321
    %v330 = vmul.f32 %v297, %v322
    %v331 = vadd.f32 %v289, %v327
    %v332 = vadd.f32 %v290, %v328
    %v333 = vadd.f32 %v291, %v329
    %v334 = vadd.f32 %v292, %v330
    %s335 = scalar_lea.vmem [#allocation2], 6
    %v336 = vld [vmem:[%s335] ss:$8 sm:$0xf]
    %337 = vset.pattern.permute.xlu0 6
    %338 = vperm.xlu0 %337, %v91
    %v339 = vpop.permute.xlu0 %338
    %v342 = vperm.slane %v336, 0
    %v343 = vperm.slane %v336, 1
    %v344 = vperm.slane %v336, 2
    %v345 = vperm.slane %v336, 3
    %v350 = vmul.f32 %v339, %v342
    %v351 = vmul.f32 %v339, %v343
    %v352 = vmul.f32 %v339, %v344
    %v353 = vmul.f32 %v339, %v345
    %v354 = vadd.f32 %v312, %v350
    %v355 = vadd.f32 %v313, %v351
    %v356 = vadd.f32 %v314, %v352
    %v357 = vadd.f32 %v315, %v353
    %s358 = scalar_lea.vmem [#allocation4], 6
    %v359 = vld [vmem:[%s358] ss:$8 sm:$0xf]
    %v361 = vperm.slane %v359, 0
    %v362 = vperm.slane %v359, 1
    %v363 = vperm.slane %v359, 2
    %v364 = vperm.slane %v359, 3
    %v369 = vmul.f32 %v339, %v361
    %v370 = vmul.f32 %v339, %v362
    %v371 = vmul.f32 %v339, %v363
    %v372 = vmul.f32 %v339, %v364
    %v373 = vadd.f32 %v331, %v369
    %v374 = vadd.f32 %v332, %v370
    %v375 = vadd.f32 %v333, %v371
    %v376 = vadd.f32 %v334, %v372
    %s377 = scalar_lea.vmem [#allocation2], 7
    %v378 = vld [vmem:[%s377] ss:$8 sm:$0xf]
    %379 = vset.pattern.permute.xlu0 7
    %380 = vperm.xlu0 %379, %v91
    %v381 = vpop.permute.xlu0 %380
    %v384 = vperm.slane %v378, 0
    %v385 = vperm.slane %v378, 1
    %v386 = vperm.slane %v378, 2
    %v387 = vperm.slane %v378, 3
    %v392 = vmul.f32 %v381, %v384
    %v393 = vmul.f32 %v381, %v385
    %v394 = vmul.f32 %v381, %v386
    %v395 = vmul.f32 %v381, %v387
    %v396 = vadd.f32 %v354, %v392
    %v397 = vadd.f32 %v355, %v393
    %v398 = vadd.f32 %v356, %v394
    %v399 = vadd.f32 %v357, %v395
    %s400 = scalar_lea.vmem [#allocation4], 7
    %v401 = vld [vmem:[%s400] ss:$8 sm:$0xf]
    %v403 = vperm.slane %v401, 0
    %v404 = vperm.slane %v401, 1
    %v405 = vperm.slane %v401, 2
    %v406 = vperm.slane %v401, 3
    %v411 = vmul.f32 %v381, %v403
    %v412 = vmul.f32 %v381, %v404
    %v413 = vmul.f32 %v381, %v405
    %v414 = vmul.f32 %v381, %v406
    %v415 = vadd.f32 %v373, %v411
    %v416 = vadd.f32 %v374, %v412
    %v417 = vadd.f32 %v375, %v413
    %v418 = vadd.f32 %v376, %v414
    %v419 = vld [vmem:[%s3] ss:$2 sm:$0xf]
    %v421 = vperm.slane %v419, 0
    %v422 = vperm.slane %v419, 1
    %v423 = vperm.slane %v419, 2
    %v424 = vperm.slane %v419, 3
    %v429 = vadd.f32 %v396, %v421
    %v430 = vadd.f32 %v397, %v422
    %v431 = vadd.f32 %v398, %v423
    %v432 = vadd.f32 %v399, %v424
    %v433 = vmax.f32 %v429, 0.0
    %v434 = vmax.f32 %v430, 0.0
    %v435 = vmax.f32 %v431, 0.0
    %v436 = vmax.f32 %v432, 0.0
    %s437 = scalar_lea.vmem %s3, 1
    %v438 = vld [vmem:[%s437] ss:$2 sm:$0xf]
    %v440 = vperm.slane %v438, 0
    %v441 = vperm.slane %v438, 1
    %v442 = vperm.slane %v438, 2
    %v443 = vperm.slane %v438, 3
    %v448 = vadd.f32 %v415, %v440
    %v449 = vadd.f32 %v416, %v441
    %v450 = vadd.f32 %v417, %v442
    %v451 = vadd.f32 %v418, %v443
    %v452 = vmax.f32 %v448, 0.0
    %v453 = vmax.f32 %v449, 0.0
    %v454 = vmax.f32 %v450, 0.0
    %v455 = vmax.f32 %v451, 0.0
    %v456 = vld [vmem:[#allocation6] sm:$0xff]
    %v457 = vld [vmem:[#allocation6 + $0x8] sm:$0xff]
    %v458 = vld [vmem:[#allocation6 + $0x10] sm:$0xff]
    %v459 = vld [vmem:[#allocation6 + $0x18] sm:$0xff]
    %v460 = vld [vmem:[#allocation6 + $0x20] sm:$0xff]
    %v461 = vld [vmem:[#allocation6 + $0x28] sm:$0xff]
    %v462 = vld [vmem:[#allocation6 + $0x30] sm:$0xff]
    %v463 = vld [vmem:[#allocation6 + $0x38] sm:$0xff]
    %v464 = vld [vmem:[#allocation6 + $0x40] sm:$0xff]
    %v465 = vld [vmem:[#allocation6 + $0x48] sm:$0xff]
    %v466 = vld [vmem:[#allocation6 + $0x50] sm:$0xff]
    %v467 = vld [vmem:[#allocation6 + $0x58] sm:$0xff]
    %v468 = vld [vmem:[#allocation6 + $0x60] sm:$0xff]
    %v469 = vld [vmem:[#allocation6 + $0x68] sm:$0xff]
    %v470 = vld [vmem:[#allocation6 + $0x70] sm:$0xff]
    %v471 = vld [vmem:[#allocation6 + $0x78] sm:$0xff]
    %v472 = vld [vmem:[#allocation6 + $0x80] sm:$0xff]
    %v473 = vld [vmem:[#allocation6 + $0x88] sm:$0xff]
    %v474 = vld [vmem:[#allocation6 + $0x90] sm:$0xff]
    %v475 = vld [vmem:[#allocation6 + $0x98] sm:$0xff]
    %v476 = vld [vmem:[#allocation6 + $0xa0] sm:$0xff]
    %v477 = vld [vmem:[#allocation6 + $0xa8] sm:$0xff]
    %v478 = vld [vmem:[#allocation6 + $0xb0] sm:$0xff]
    %v479 = vld [vmem:[#allocation6 + $0xb8] sm:$0xff]
    %v480 = vld [vmem:[#allocation6 + $0xc0] sm:$0xff]
    %v481 = vld [vmem:[#allocation6 + $0xc8] sm:$0xff]
    %v482 = vld [vmem:[#allocation6 + $0xd0] sm:$0xff]
    %v483 = vld [vmem:[#allocation6 + $0xd8] sm:$0xff]
    %v484 = vld [vmem:[#allocation6 + $0xe0] sm:$0xff]
    %v485 = vld [vmem:[#allocation6 + $0xe8] sm:$0xff]
    %v486 = vld [vmem:[#allocation6 + $0xf0] sm:$0xff]
    %v487 = vld [vmem:[#allocation6 + $0xf8] sm:$0xff]
    %v488 = vld [vmem:[#allocation6 + $0x100] sm:$0xff]
    %v489 = vld [vmem:[#allocation6 + $0x108] sm:$0xff]
    %v490 = vld [vmem:[#allocation6 + $0x110] sm:$0xff]
    %v491 = vld [vmem:[#allocation6 + $0x118] sm:$0xff]
    %v492 = vld [vmem:[#allocation6 + $0x120] sm:$0xff]
    %v493 = vld [vmem:[#allocation6 + $0x128] sm:$0xff]
    %v494 = vld [vmem:[#allocation6 + $0x130] sm:$0xff]
    %v495 = vld [vmem:[#allocation6 + $0x138] sm:$0xff]
    %v496 = vld [vmem:[#allocation6 + $0x140] sm:$0xff]
    %v497 = vld [vmem:[#allocation6 + $0x148] sm:$0xff]
    %v498 = vld [vmem:[#allocation6 + $0x150] sm:$0xff]
    %v499 = vld [vmem:[#allocation6 + $0x158] sm:$0xff]
    %v500 = vld [vmem:[#allocation6 + $0x160] sm:$0xff]
    %v501 = vld [vmem:[#allocation6 + $0x168] sm:$0xff]
    %v502 = vld [vmem:[#allocation6 + $0x170] sm:$0xff]
    %v503 = vld [vmem:[#allocation6 + $0x178] sm:$0xff]
    %v504 = vld [vmem:[#allocation6 + $0x180] sm:$0xff]
    %v505 = vld [vmem:[#allocation6 + $0x188] sm:$0xff]
    %v506 = vld [vmem:[#allocation6 + $0x190] sm:$0xff]
    %v507 = vld [vmem:[#allocation6 + $0x198] sm:$0xff]
    %v508 = vld [vmem:[#allocation6 + $0x1a0] sm:$0xff]
    %v509 = vld [vmem:[#allocation6 + $0x1a8] sm:$0xff]
    %v510 = vld [vmem:[#allocation6 + $0x1b0] sm:$0xff]
    %v511 = vld [vmem:[#allocation6 + $0x1b8] sm:$0xff]
    %v512 = vld [vmem:[#allocation6 + $0x1c0] sm:$0xff]
    %v513 = vld [vmem:[#allocation6 + $0x1c8] sm:$0xff]
    %v514 = vld [vmem:[#allocation6 + $0x1d0] sm:$0xff]
    %v515 = vld [vmem:[#allocation6 + $0x1d8] sm:$0xff]
    %v516 = vld [vmem:[#allocation6 + $0x1e0] sm:$0xff]
    %v517 = vld [vmem:[#allocation6 + $0x1e8] sm:$0xff]
    %v518 = vld [vmem:[#allocation6 + $0x1f0] sm:$0xff]
    %v519 = vld [vmem:[#allocation6 + $0x1f8] sm:$0xff]
    %v520 = vld [vmem:[#allocation6 + $0x200] sm:$0xff]
    %v521 = vld [vmem:[#allocation6 + $0x208] sm:$0xff]
    %v522 = vld [vmem:[#allocation6 + $0x210] sm:$0xff]
    %v523 = vld [vmem:[#allocation6 + $0x218] sm:$0xff]
    %v524 = vld [vmem:[#allocation6 + $0x220] sm:$0xff]
    %v525 = vld [vmem:[#allocation6 + $0x228] sm:$0xff]
    %v526 = vld [vmem:[#allocation6 + $0x230] sm:$0xff]
    %v527 = vld [vmem:[#allocation6 + $0x238] sm:$0xff]
    %v528 = vld [vmem:[#allocation6 + $0x240] sm:$0xff]
    %v529 = vld [vmem:[#allocation6 + $0x248] sm:$0xff]
    %v530 = vld [vmem:[#allocation6 + $0x250] sm:$0xff]
    %v531 = vld [vmem:[#allocation6 + $0x258] sm:$0xff]
    %v532 = vld [vmem:[#allocation6 + $0x260] sm:$0xff]
    %v533 = vld [vmem:[#allocation6 + $0x268] sm:$0xff]
    %v534 = vld [vmem:[#allocation6 + $0x270] sm:$0xff]
    %v535 = vld [vmem:[#allocation6 + $0x278] sm:$0xff]
    %v536 = vld [vmem:[#allocation6 + $0x280] sm:$0xff]
    %v537 = vld [vmem:[#allocation6 + $0x288] sm:$0xff]
    %v538 = vld [vmem:[#allocation6 + $0x290] sm:$0xff]
    %v539 = vld [vmem:[#allocation6 + $0x298] sm:$0xff]
    %v540 = vld [vmem:[#allocation6 + $0x2a0] sm:$0xff]
    %v541 = vld [vmem:[#allocation6 + $0x2a8] sm:$0xff]
    %v542 = vld [vmem:[#allocation6 + $0x2b0] sm:$0xff]
    %v543 = vld [vmem:[#allocation6 + $0x2b8] sm:$0xff]
    %v544 = vld [vmem:[#allocation6 + $0x2c0] sm:$0xff]
    %v545 = vld [vmem:[#allocation6 + $0x2c8] sm:$0xff]
    %v546 = vld [vmem:[#allocation6 + $0x2d0] sm:$0xff]
    %v547 = vld [vmem:[#allocation6 + $0x2d8] sm:$0xff]
    %v548 = vld [vmem:[#allocation6 + $0x2e0] sm:$0xff]
    %v549 = vld [vmem:[#allocation6 + $0x2e8] sm:$0xff]
    %v550 = vld [vmem:[#allocation6 + $0x2f0] sm:$0xff]
    %v551 = vld [vmem:[#allocation6 + $0x2f8] sm:$0xff]
    %v552 = vld [vmem:[#allocation6 + $0x300] sm:$0xff]
    %v553 = vld [vmem:[#allocation6 + $0x308] sm:$0xff]
    %v554 = vld [vmem:[#allocation6 + $0x310] sm:$0xff]
    %v555 = vld [vmem:[#allocation6 + $0x318] sm:$0xff]
    %v556 = vld [vmem:[#allocation6 + $0x320] sm:$0xff]
    %v557 = vld [vmem:[#allocation6 + $0x328] sm:$0xff]
    %v558 = vld [vmem:[#allocation6 + $0x330] sm:$0xff]
    %v559 = vld [vmem:[#allocation6 + $0x338] sm:$0xff]
    %v560 = vld [vmem:[#allocation6 + $0x340] sm:$0xff]
    %v561 = vld [vmem:[#allocation6 + $0x348] sm:$0xff]
    %v562 = vld [vmem:[#allocation6 + $0x350] sm:$0xff]
    %v563 = vld [vmem:[#allocation6 + $0x358] sm:$0xff]
    %v564 = vld [vmem:[#allocation6 + $0x360] sm:$0xff]
    %v565 = vld [vmem:[#allocation6 + $0x368] sm:$0xff]
    %v566 = vld [vmem:[#allocation6 + $0x370] sm:$0xff]
    %v567 = vld [vmem:[#allocation6 + $0x378] sm:$0xff]
    %v568 = vld [vmem:[#allocation6 + $0x380] sm:$0xff]
    %v569 = vld [vmem:[#allocation6 + $0x388] sm:$0xff]
    %v570 = vld [vmem:[#allocation6 + $0x390] sm:$0xff]
    %v571 = vld [vmem:[#allocation6 + $0x398] sm:$0xff]
    %v572 = vld [vmem:[#allocation6 + $0x3a0] sm:$0xff]
    %v573 = vld [vmem:[#allocation6 + $0x3a8] sm:$0xff]
    %v574 = vld [vmem:[#allocation6 + $0x3b0] sm:$0xff]
    %v575 = vld [vmem:[#allocation6 + $0x3b8] sm:$0xff]
    %v576 = vld [vmem:[#allocation6 + $0x3c0] sm:$0xff]
    %v577 = vld [vmem:[#allocation6 + $0x3c8] sm:$0xff]
    %v578 = vld [vmem:[#allocation6 + $0x3d0] sm:$0xff]
    %v579 = vld [vmem:[#allocation6 + $0x3d8] sm:$0xff]
    %v580 = vld [vmem:[#allocation6 + $0x3e0] sm:$0xff]
    %v581 = vld [vmem:[#allocation6 + $0x3e8] sm:$0xff]
    %v582 = vld [vmem:[#allocation6 + $0x3f0] sm:$0xff]
    %v583 = vld [vmem:[#allocation6 + $0x3f8] sm:$0xff]
    %v584 = vld [vmem:[#allocation6 + $0x400] sm:$0xff]
    %v585 = vld [vmem:[#allocation6 + $0x408] sm:$0xff]
    %v586 = vld [vmem:[#allocation6 + $0x410] sm:$0xff]
    %v587 = vld [vmem:[#allocation6 + $0x418] sm:$0xff]
    %v588 = vld [vmem:[#allocation6 + $0x420] sm:$0xff]
    %v589 = vld [vmem:[#allocation6 + $0x428] sm:$0xff]
    %v590 = vld [vmem:[#allocation6 + $0x430] sm:$0xff]
    %v591 = vld [vmem:[#allocation6 + $0x438] sm:$0xff]
    %v592 = vld [vmem:[#allocation6 + $0x440] sm:$0xff]
    %v593 = vld [vmem:[#allocation6 + $0x448] sm:$0xff]
    %v594 = vld [vmem:[#allocation6 + $0x450] sm:$0xff]
    %v595 = vld [vmem:[#allocation6 + $0x458] sm:$0xff]
    %v596 = vld [vmem:[#allocation6 + $0x460] sm:$0xff]
    %v597 = vld [vmem:[#allocation6 + $0x468] sm:$0xff]
    %v598 = vld [vmem:[#allocation6 + $0x470] sm:$0xff]
    %v599 = vld [vmem:[#allocation6 + $0x478] sm:$0xff]
    %v600 = vld [vmem:[#allocation6 + $0x480] sm:$0xff]
    %v601 = vld [vmem:[#allocation6 + $0x488] sm:$0xff]
    %v602 = vld [vmem:[#allocation6 + $0x490] sm:$0xff]
    %v603 = vld [vmem:[#allocation6 + $0x498] sm:$0xff]
    %v604 = vld [vmem:[#allocation6 + $0x4a0] sm:$0xff]
    %v605 = vld [vmem:[#allocation6 + $0x4a8] sm:$0xff]
    %v606 = vld [vmem:[%s6] ss:$2 sm:$0x7]
    %v608 = vperm.slane %v606, 0
    %v609 = vperm.slane %v606, 1
    %v610 = vperm.slane %v606, 2
    %vm614 = vcmask 130048
    %v616 = vsel %vm614, %v436, 0
    %618 = vmatpush.msra.mxu0 %v501
    %619 = vmatpush.msra.mxu0 %v498
    %620 = vmatpush.msra.mxu0 %v495
    %621 = vmatpush.msra.mxu0 %v492
    %622 = vmatpush.msra.mxu0 %v489
    %623 = vmatpush.msra.mxu0 %v486
    %624 = vmatpush.msra.mxu0 %v483
    %625 = vmatpush.msra.mxu0 %v480
    %626 = vmatpush.msra.mxu0 %v477
    %627 = vmatpush.msra.mxu0 %v474
    %628 = vmatpush.msra.mxu0 %v471
    %629 = vmatpush.msra.mxu0 %v468
    %630 = vmatpush.msra.mxu0 %v465
    %631 = vmatpush.msra.mxu0 %v462
    %632 = vmatpush.msra.mxu0 %v459
    %633 = vmatpush.msra.mxu0 %v456
    %634 = vmatmul.f32.gmra.mxu0 %v433
    %v635 = vpop.f32.mrf.mxu0
    %v636 = vadd.f32 %v608, %v635
    %637 = vdwg.mxu0
    %638 = vmatpush.msra.mxu0 %v549
    %639 = vmatpush.msra.mxu0 %v546
    %640 = vmatpush.msra.mxu0 %v543
    %641 = vmatpush.msra.mxu0 %v540
    %642 = vmatpush.msra.mxu0 %v537
    %643 = vmatpush.msra.mxu0 %v534
    %644 = vmatpush.msra.mxu0 %v531
    %645 = vmatpush.msra.mxu0 %v528
    %646 = vmatpush.msra.mxu0 %v525
    %647 = vmatpush.msra.mxu0 %v522
    %648 = vmatpush.msra.mxu0 %v519
    %649 = vmatpush.msra.mxu0 %v516
    %650 = vmatpush.msra.mxu0 %v513
    %651 = vmatpush.msra.mxu0 %v510
    %652 = vmatpush.msra.mxu0 %v507
    %653 = vmatpush.msra.mxu0 %v504
    %654 = vmatmul.f32.gmra.mxu0 %v434
    %v655 = vpop.f32.mrf.mxu0
    %v656 = vadd.f32 %v636, %v655
    %657 = vdwg.mxu0
    %658 = vmatpush.msra.mxu0 %v597
    %659 = vmatpush.msra.mxu0 %v594
    %660 = vmatpush.msra.mxu0 %v591
    %661 = vmatpush.msra.mxu0 %v588
    %662 = vmatpush.msra.mxu0 %v585
    %663 = vmatpush.msra.mxu0 %v582
    %664 = vmatpush.msra.mxu0 %v579
    %665 = vmatpush.msra.mxu0 %v576
    %666 = vmatpush.msra.mxu0 %v573
    %667 = vmatpush.msra.mxu0 %v570
    %668 = vmatpush.msra.mxu0 %v567
    %669 = vmatpush.msra.mxu0 %v564
    %670 = vmatpush.msra.mxu0 %v561
    %671 = vmatpush.msra.mxu0 %v558
    %672 = vmatpush.msra.mxu0 %v555
    %673 = vmatpush.msra.mxu0 %v552
    %674 = vmatmul.f32.gmra.mxu0 %v435
    %v675 = vpop.f32.mrf.mxu0
    %v676 = vadd.f32 %v656, %v675
    %677 = vdwg.mxu0
    %678 = vmatpush.msra.mxu0 0.0
    %679 = vmatpush.msra.mxu0 0.0
    %680 = vmatpush.msra.mxu0 0.0
    %681 = vmatpush.msra.mxu0 0.0
    %682 = vmatpush.msra.mxu0 0.0
    %683 = vmatpush.msra.mxu0 0.0
    %684 = vmatpush.msra.mxu0 0.0
    %685 = vmatpush.msra.mxu0 0.0
    %686 = vmatpush.msra.mxu0 0.0
    %687 = vmatpush.msra.mxu0 0.0
    %688 = vmatpush.msra.mxu0 0.0
    %689 = vmatpush.msra.mxu0 0.0
    %690 = vmatpush.msra.mxu0 0.0
    %691 = vmatpush.msra.mxu0 0.0
    %692 = vmatpush.msra.mxu0 %v603
    %693 = vmatpush.msra.mxu0 %v600
    %694 = vmatmul.f32.gmra.mxu0 %v616
    %v695 = vpop.f32.mrf.mxu0
    %v696 = vadd.f32 %v676, %v695
    %697 = vdwg.mxu0
    %698 = vmatpush.msra.mxu0 %v502
    %699 = vmatpush.msra.mxu0 %v499
    %700 = vmatpush.msra.mxu0 %v496
    %701 = vmatpush.msra.mxu0 %v493
    %702 = vmatpush.msra.mxu0 %v490
    %703 = vmatpush.msra.mxu0 %v487
    %704 = vmatpush.msra.mxu0 %v484
    %705 = vmatpush.msra.mxu0 %v481
    %706 = vmatpush.msra.mxu0 %v478
    %707 = vmatpush.msra.mxu0 %v475
    %708 = vmatpush.msra.mxu0 %v472
    %709 = vmatpush.msra.mxu0 %v469
    %710 = vmatpush.msra.mxu0 %v466
    %711 = vmatpush.msra.mxu0 %v463
    %712 = vmatpush.msra.mxu0 %v460
    %713 = vmatpush.msra.mxu0 %v457
    %714 = vmatmul.f32.gmra.mxu0 %v433
    %v715 = vpop.f32.mrf.mxu0
    %v716 = vadd.f32 %v609, %v715
    %717 = vdwg.mxu0
    %718 = vmatpush.msra.mxu0 %v550
    %719 = vmatpush.msra.mxu0 %v547
    %720 = vmatpush.msra.mxu0 %v544
    %721 = vmatpush.msra.mxu0 %v541
    %722 = vmatpush.msra.mxu0 %v538
    %723 = vmatpush.msra.mxu0 %v535
    %724 = vmatpush.msra.mxu0 %v532
    %725 = vmatpush.msra.mxu0 %v529
    %726 = vmatpush.msra.mxu0 %v526
    %727 = vmatpush.msra.mxu0 %v523
    %728 = vmatpush.msra.mxu0 %v520
    %729 = vmatpush.msra.mxu0 %v517
    %730 = vmatpush.msra.mxu0 %v514
    %731 = vmatpush.msra.mxu0 %v511
    %732 = vmatpush.msra.mxu0 %v508
    %733 = vmatpush.msra.mxu0 %v505
    %734 = vmatmul.f32.gmra.mxu0 %v434
    %v735 = vpop.f32.mrf.mxu0
    %v736 = vadd.f32 %v716, %v735
    %737 = vdwg.mxu0
    %738 = vmatpush.msra.mxu0 %v598
    %739 = vmatpush.msra.mxu0 %v595
    %740 = vmatpush.msra.mxu0 %v592
    %741 = vmatpush.msra.mxu0 %v589
    %742 = vmatpush.msra.mxu0 %v586
    %743 = vmatpush.msra.mxu0 %v583
    %744 = vmatpush.msra.mxu0 %v580
    %745 = vmatpush.msra.mxu0 %v577
    %746 = vmatpush.msra.mxu0 %v574
    %747 = vmatpush.msra.mxu0 %v571
    %748 = vmatpush.msra.mxu0 %v568
    %749 = vmatpush.msra.mxu0 %v565
    %750 = vmatpush.msra.mxu0 %v562
    %751 = vmatpush.msra.mxu0 %v559
    %752 = vmatpush.msra.mxu0 %v556
    %753 = vmatpush.msra.mxu0 %v553
    %754 = vmatmul.f32.gmra.mxu0 %v435
    %v755 = vpop.f32.mrf.mxu0
    %v756 = vadd.f32 %v736, %v755
    %757 = vdwg.mxu0
    %758 = vmatpush.msra.mxu0 0.0
    %759 = vmatpush.msra.mxu0 0.0
    %760 = vmatpush.msra.mxu0 0.0
    %761 = vmatpush.msra.mxu0 0.0
    %762 = vmatpush.msra.mxu0 0.0
    %763 = vmatpush.msra.mxu0 0.0
    %764 = vmatpush.msra.mxu0 0.0
    %765 = vmatpush.msra.mxu0 0.0
    %766 = vmatpush.msra.mxu0 0.0
    %767 = vmatpush.msra.mxu0 0.0
    %768 = vmatpush.msra.mxu0 0.0
    %769 = vmatpush.msra.mxu0 0.0
    %770 = vmatpush.msra.mxu0 0.0
    %771 = vmatpush.msra.mxu0 0.0
    %772 = vmatpush.msra.mxu0 %v604
    %773 = vmatpush.msra.mxu0 %v601
    %774 = vmatmul.f32.gmra.mxu0 %v616
    %v775 = vpop.f32.mrf.mxu0
    %v776 = vadd.f32 %v756, %v775
    %777 = vdwg.mxu0
    %778 = vmatpush.msra.mxu0 %v503
    %779 = vmatpush.msra.mxu0 %v500
    %780 = vmatpush.msra.mxu0 %v497
    %781 = vmatpush.msra.mxu0 %v494
    %782 = vmatpush.msra.mxu0 %v491
    %783 = vmatpush.msra.mxu0 %v488
    %784 = vmatpush.msra.mxu0 %v485
    %785 = vmatpush.msra.mxu0 %v482
    %786 = vmatpush.msra.mxu0 %v479
    %787 = vmatpush.msra.mxu0 %v476
    %788 = vmatpush.msra.mxu0 %v473
    %789 = vmatpush.msra.mxu0 %v470
    %790 = vmatpush.msra.mxu0 %v467
    %791 = vmatpush.msra.mxu0 %v464
    %792 = vmatpush.msra.mxu0 %v461
    %793 = vmatpush.msra.mxu0 %v458
    %794 = vmatmul.f32.gmra.mxu0 %v433
    %v795 = vpop.f32.mrf.mxu0
    %v796 = vadd.f32 %v610, %v795
    %797 = vdwg.mxu0
    %798 = vmatpush.msra.mxu0 %v551
    %799 = vmatpush.msra.mxu0 %v548
    %800 = vmatpush.msra.mxu0 %v545
    %801 = vmatpush.msra.mxu0 %v542
    %802 = vmatpush.msra.mxu0 %v539
    %803 = vmatpush.msra.mxu0 %v536
    %804 = vmatpush.msra.mxu0 %v533
    %805 = vmatpush.msra.mxu0 %v530
    %806 = vmatpush.msra.mxu0 %v527
    %807 = vmatpush.msra.mxu0 %v524
    %808 = vmatpush.msra.mxu0 %v521
    %809 = vmatpush.msra.mxu0 %v518
    %810 = vmatpush.msra.mxu0 %v515
    %811 = vmatpush.msra.mxu0 %v512
    %812 = vmatpush.msra.mxu0 %v509
    %813 = vmatpush.msra.mxu0 %v506
    %814 = vmatmul.f32.gmra.mxu0 %v434
    %v815 = vpop.f32.mrf.mxu0
    %v816 = vadd.f32 %v796, %v815
    %817 = vdwg.mxu0
    %818 = vmatpush.msra.mxu0 %v599
    %819 = vmatpush.msra.mxu0 %v596
    %820 = vmatpush.msra.mxu0 %v593
    %821 = vmatpush.msra.mxu0 %v590
    %822 = vmatpush.msra.mxu0 %v587
    %823 = vmatpush.msra.mxu0 %v584
    %824 = vmatpush.msra.mxu0 %v581
    %825 = vmatpush.msra.mxu0 %v578
    %826 = vmatpush.msra.mxu0 %v575
    %827 = vmatpush.msra.mxu0 %v572
    %828 = vmatpush.msra.mxu0 %v569
    %829 = vmatpush.msra.mxu0 %v566
    %830 = vmatpush.msra.mxu0 %v563
    %831 = vmatpush.msra.mxu0 %v560
    %832 = vmatpush.msra.mxu0 %v557
    %833 = vmatpush.msra.mxu0 %v554
    %834 = vmatmul.f32.gmra.mxu0 %v435
    %v835 = vpop.f32.mrf.mxu0
    %v836 = vadd.f32 %v816, %v835
    %837 = vdwg.mxu0
    %838 = vmatpush.msra.mxu0 0.0
    %839 = vmatpush.msra.mxu0 0.0
    %840 = vmatpush.msra.mxu0 0.0
    %841 = vmatpush.msra.mxu0 0.0
    %842 = vmatpush.msra.mxu0 0.0
    %843 = vmatpush.msra.mxu0 0.0
    %844 = vmatpush.msra.mxu0 0.0
    %845 = vmatpush.msra.mxu0 0.0
    %846 = vmatpush.msra.mxu0 0.0
    %847 = vmatpush.msra.mxu0 0.0
    %848 = vmatpush.msra.mxu0 0.0
    %849 = vmatpush.msra.mxu0 0.0
    %850 = vmatpush.msra.mxu0 0.0
    %851 = vmatpush.msra.mxu0 0.0
    %852 = vmatpush.msra.mxu0 %v605
    %853 = vmatpush.msra.mxu0 %v602
    %854 = vmatmul.f32.gmra.mxu0 %v616
    %v855 = vpop.f32.mrf.mxu0
    %v856 = vadd.f32 %v836, %v855
    %857 = vdwg.mxu0
    %v858 = vmax.f32 %v696, 0.0
    %v859 = vmax.f32 %v776, 0.0
    %v860 = vmax.f32 %v856, 0.0
    %v861 = vld [vmem:[#allocation7] sm:$0xff]
    %v862 = vld [vmem:[#allocation7 + $0x8] sm:$0xff]
    %v863 = vld [vmem:[#allocation7 + $0x10] sm:$0xff]
    %v864 = vld [vmem:[#allocation7 + $0x18] sm:$0xff]
    %v865 = vld [vmem:[#allocation7 + $0x20] sm:$0xff]
    %v866 = vld [vmem:[#allocation7 + $0x28] sm:$0xff]
    %v867 = vld [vmem:[#allocation7 + $0x30] sm:$0xff]
    %v868 = vld [vmem:[#allocation7 + $0x38] sm:$0xff]
    %v869 = vld [vmem:[#allocation7 + $0x40] sm:$0xff]
    %v870 = vld [vmem:[#allocation7 + $0x48] sm:$0xff]
    %v871 = vld [vmem:[#allocation7 + $0x50] sm:$0xff]
    %v872 = vld [vmem:[#allocation7 + $0x58] sm:$0xff]
    %v873 = vld [vmem:[#allocation7 + $0x60] sm:$0xff]
    %v874 = vld [vmem:[#allocation7 + $0x68] sm:$0xff]
    %v875 = vld [vmem:[#allocation7 + $0x70] sm:$0xff]
    %v876 = vld [vmem:[#allocation7 + $0x78] sm:$0xff]
    %v877 = vld [vmem:[#allocation7 + $0x80] sm:$0xff]
    %v878 = vld [vmem:[#allocation7 + $0x88] sm:$0xff]
    %v879 = vld [vmem:[#allocation7 + $0x90] sm:$0xff]
    %v880 = vld [vmem:[#allocation7 + $0x98] sm:$0xff]
    %v881 = vld [vmem:[#allocation7 + $0xa0] sm:$0xff]
    %v882 = vld [vmem:[#allocation7 + $0xa8] sm:$0xff]
    %v883 = vld [vmem:[#allocation7 + $0xb0] sm:$0xff]
    %v884 = vld [vmem:[#allocation7 + $0xb8] sm:$0xff]
    %v885 = vld [vmem:[#allocation7 + $0xc0] sm:$0xff]
    %v886 = vld [vmem:[#allocation7 + $0xc8] sm:$0xff]
    %v887 = vld [vmem:[#allocation7 + $0xd0] sm:$0xff]
    %v888 = vld [vmem:[#allocation7 + $0xd8] sm:$0xff]
    %v889 = vld [vmem:[#allocation7 + $0xe0] sm:$0xff]
    %v890 = vld [vmem:[#allocation7 + $0xe8] sm:$0xff]
    %v891 = vld [vmem:[#allocation7 + $0xf0] sm:$0xff]
    %v892 = vld [vmem:[#allocation7 + $0xf8] sm:$0xff]
    %v893 = vld [vmem:[#allocation7 + $0x100] sm:$0xff]
    %v894 = vld [vmem:[#allocation7 + $0x108] sm:$0xff]
    %v895 = vld [vmem:[#allocation7 + $0x110] sm:$0xff]
    %v896 = vld [vmem:[#allocation7 + $0x118] sm:$0xff]
    %v897 = vld [vmem:[#allocation7 + $0x120] sm:$0xff]
    %v898 = vld [vmem:[#allocation7 + $0x128] sm:$0xff]
    %v899 = vld [vmem:[#allocation7 + $0x130] sm:$0xff]
    %v900 = vld [vmem:[#allocation7 + $0x138] sm:$0xff]
    %v901 = vld [vmem:[#allocation7 + $0x140] sm:$0xff]
    %v902 = vld [vmem:[#allocation7 + $0x148] sm:$0xff]
    %v903 = vld [vmem:[#allocation7 + $0x150] sm:$0xff]
    %v904 = vld [vmem:[#allocation7 + $0x158] sm:$0xff]
    %v905 = vld [vmem:[#allocation7 + $0x160] sm:$0xff]
    %v906 = vld [vmem:[#allocation7 + $0x168] sm:$0xff]
    %v907 = vld [vmem:[#allocation7 + $0x170] sm:$0xff]
    %v908 = vld [vmem:[#allocation7 + $0x178] sm:$0xff]
    %v909 = vld [vmem:[#allocation7 + $0x180] sm:$0xff]
    %v910 = vld [vmem:[#allocation7 + $0x188] sm:$0xff]
    %v911 = vld [vmem:[#allocation7 + $0x190] sm:$0xff]
    %v912 = vld [vmem:[#allocation7 + $0x198] sm:$0xff]
    %v913 = vld [vmem:[#allocation7 + $0x1a0] sm:$0xff]
    %v914 = vld [vmem:[#allocation7 + $0x1a8] sm:$0xff]
    %v915 = vld [vmem:[#allocation7 + $0x1b0] sm:$0xff]
    %v916 = vld [vmem:[#allocation7 + $0x1b8] sm:$0xff]
    %v917 = vld [vmem:[#allocation7 + $0x1c0] sm:$0xff]
    %v918 = vld [vmem:[#allocation7 + $0x1c8] sm:$0xff]
    %v919 = vld [vmem:[#allocation7 + $0x1d0] sm:$0xff]
    %v920 = vld [vmem:[#allocation7 + $0x1d8] sm:$0xff]
    %v921 = vld [vmem:[#allocation7 + $0x1e0] sm:$0xff]
    %v922 = vld [vmem:[#allocation7 + $0x1e8] sm:$0xff]
    %v923 = vld [vmem:[#allocation7 + $0x1f0] sm:$0xff]
    %v924 = vld [vmem:[#allocation7 + $0x1f8] sm:$0xff]
    %v925 = vld [vmem:[#allocation7 + $0x200] sm:$0xff]
    %v926 = vld [vmem:[#allocation7 + $0x208] sm:$0xff]
    %v927 = vld [vmem:[#allocation7 + $0x210] sm:$0xff]
    %v928 = vld [vmem:[#allocation7 + $0x218] sm:$0xff]
    %v929 = vld [vmem:[#allocation7 + $0x220] sm:$0xff]
    %v930 = vld [vmem:[#allocation7 + $0x228] sm:$0xff]
    %v931 = vld [vmem:[#allocation7 + $0x230] sm:$0xff]
    %v932 = vld [vmem:[#allocation7 + $0x238] sm:$0xff]
    %v933 = vld [vmem:[#allocation7 + $0x240] sm:$0xff]
    %v934 = vld [vmem:[#allocation7 + $0x248] sm:$0xff]
    %v935 = vld [vmem:[#allocation7 + $0x250] sm:$0xff]
    %v936 = vld [vmem:[#allocation7 + $0x258] sm:$0xff]
    %v937 = vld [vmem:[#allocation7 + $0x260] sm:$0xff]
    %v938 = vld [vmem:[#allocation7 + $0x268] sm:$0xff]
    %v939 = vld [vmem:[#allocation7 + $0x270] sm:$0xff]
    %v940 = vld [vmem:[#allocation7 + $0x278] sm:$0xff]
    %v941 = vld [vmem:[#allocation7 + $0x280] sm:$0xff]
    %v942 = vld [vmem:[#allocation7 + $0x288] sm:$0xff]
    %v943 = vld [vmem:[#allocation7 + $0x290] sm:$0xff]
    %v944 = vld [vmem:[#allocation7 + $0x298] sm:$0xff]
    %v945 = vld [vmem:[#allocation7 + $0x2a0] sm:$0xff]
    %v946 = vld [vmem:[#allocation7 + $0x2a8] sm:$0xff]
    %v947 = vld [vmem:[#allocation7 + $0x2b0] sm:$0xff]
    %v948 = vld [vmem:[#allocation7 + $0x2b8] sm:$0xff]
    %v949 = vld [vmem:[#allocation7 + $0x2c0] sm:$0xff]
    %v950 = vld [vmem:[#allocation7 + $0x2c8] sm:$0xff]
    %v951 = vld [vmem:[#allocation7 + $0x2d0] sm:$0xff]
    %v952 = vld [vmem:[#allocation7 + $0x2d8] sm:$0xff]
    %v953 = vld [vmem:[#allocation7 + $0x2e0] sm:$0xff]
    %v954 = vld [vmem:[#allocation7 + $0x2e8] sm:$0xff]
    %v955 = vld [vmem:[#allocation7 + $0x2f0] sm:$0xff]
    %v956 = vld [vmem:[#allocation7 + $0x2f8] sm:$0xff]
    %v957 = vld [vmem:[#allocation7 + $0x300] sm:$0xff]
    %v958 = vld [vmem:[#allocation7 + $0x308] sm:$0xff]
    %v959 = vld [vmem:[#allocation7 + $0x310] sm:$0xff]
    %v960 = vld [vmem:[#allocation7 + $0x318] sm:$0xff]
    %v961 = vld [vmem:[#allocation7 + $0x320] sm:$0xff]
    %v962 = vld [vmem:[#allocation7 + $0x328] sm:$0xff]
    %v963 = vld [vmem:[#allocation7 + $0x330] sm:$0xff]
    %v964 = vld [vmem:[#allocation7 + $0x338] sm:$0xff]
    %v965 = vld [vmem:[#allocation7 + $0x340] sm:$0xff]
    %v966 = vld [vmem:[#allocation7 + $0x348] sm:$0xff]
    %v967 = vld [vmem:[#allocation7 + $0x350] sm:$0xff]
    %v968 = vld [vmem:[#allocation7 + $0x358] sm:$0xff]
    %v969 = vld [vmem:[#allocation7 + $0x360] sm:$0xff]
    %v970 = vld [vmem:[#allocation7 + $0x368] sm:$0xff]
    %v971 = vld [vmem:[#allocation7 + $0x370] sm:$0xff]
    %v972 = vld [vmem:[#allocation7 + $0x378] sm:$0xff]
    %v973 = vld [vmem:[#allocation7 + $0x380] sm:$0xff]
    %v974 = vld [vmem:[#allocation7 + $0x388] sm:$0xff]
    %v975 = vld [vmem:[#allocation7 + $0x390] sm:$0xff]
    %v976 = vld [vmem:[#allocation7 + $0x398] sm:$0xff]
    %v977 = vld [vmem:[#allocation7 + $0x3a0] sm:$0xff]
    %v978 = vld [vmem:[#allocation7 + $0x3a8] sm:$0xff]
    %v979 = vld [vmem:[#allocation7 + $0x3b0] sm:$0xff]
    %v980 = vld [vmem:[#allocation7 + $0x3b8] sm:$0xff]
    %v981 = vld [vmem:[#allocation7 + $0x3c0] sm:$0xff]
    %v982 = vld [vmem:[#allocation7 + $0x3c8] sm:$0xff]
    %v983 = vld [vmem:[#allocation7 + $0x3d0] sm:$0xff]
    %v984 = vld [vmem:[#allocation7 + $0x3d8] sm:$0xff]
    %v985 = vld [vmem:[#allocation7 + $0x3e0] sm:$0xff]
    %v986 = vld [vmem:[#allocation7 + $0x3e8] sm:$0xff]
    %v987 = vld [vmem:[#allocation7 + $0x3f0] sm:$0xff]
    %v988 = vld [vmem:[#allocation7 + $0x3f8] sm:$0xff]
    %v989 = vld [vmem:[#allocation7 + $0x400] sm:$0xff]
    %v990 = vld [vmem:[#allocation7 + $0x408] sm:$0xff]
    %v991 = vld [vmem:[#allocation7 + $0x410] sm:$0xff]
    %v992 = vld [vmem:[#allocation7 + $0x418] sm:$0xff]
    %v993 = vld [vmem:[#allocation7 + $0x420] sm:$0xff]
    %v994 = vld [vmem:[#allocation7 + $0x428] sm:$0xff]
    %v995 = vld [vmem:[#allocation7 + $0x430] sm:$0xff]
    %v996 = vld [vmem:[#allocation7 + $0x438] sm:$0xff]
    %v997 = vld [vmem:[#allocation7 + $0x440] sm:$0xff]
    %v998 = vld [vmem:[#allocation7 + $0x448] sm:$0xff]
    %v999 = vld [vmem:[#allocation7 + $0x450] sm:$0xff]
    %v1000 = vld [vmem:[#allocation7 + $0x458] sm:$0xff]
    %v1001 = vld [vmem:[#allocation7 + $0x460] sm:$0xff]
    %v1002 = vld [vmem:[#allocation7 + $0x468] sm:$0xff]
    %v1003 = vld [vmem:[#allocation7 + $0x470] sm:$0xff]
    %v1004 = vld [vmem:[#allocation7 + $0x478] sm:$0xff]
    %v1005 = vld [vmem:[#allocation7 + $0x480] sm:$0xff]
    %v1006 = vld [vmem:[#allocation7 + $0x488] sm:$0xff]
    %v1007 = vld [vmem:[#allocation7 + $0x490] sm:$0xff]
    %v1008 = vld [vmem:[#allocation7 + $0x498] sm:$0xff]
    %v1009 = vld [vmem:[#allocation7 + $0x4a0] sm:$0xff]
    %v1010 = vld [vmem:[#allocation7 + $0x4a8] sm:$0xff]
    %s1011 = scalar_lea.vmem %s6, 1
    %v1012 = vld [vmem:[%s1011] ss:$2 sm:$0x7]
    %v1014 = vperm.slane %v1012, 0
    %v1015 = vperm.slane %v1012, 1
    %v1016 = vperm.slane %v1012, 2
    %v1021 = vsel %vm614, %v455, 0
    %1023 = vmatpush.msra.mxu0 %v906
    %1024 = vmatpush.msra.mxu0 %v903
    %1025 = vmatpush.msra.mxu0 %v900
    %1026 = vmatpush.msra.mxu0 %v897
    %1027 = vmatpush.msra.mxu0 %v894
    %1028 = vmatpush.msra.mxu0 %v891
    %1029 = vmatpush.msra.mxu0 %v888
    %1030 = vmatpush.msra.mxu0 %v885
    %1031 = vmatpush.msra.mxu0 %v882
    %1032 = vmatpush.msra.mxu0 %v879
    %1033 = vmatpush.msra.mxu0 %v876
    %1034 = vmatpush.msra.mxu0 %v873
    %1035 = vmatpush.msra.mxu0 %v870
    %1036 = vmatpush.msra.mxu0 %v867
    %1037 = vmatpush.msra.mxu0 %v864
    %1038 = vmatpush.msra.mxu0 %v861
    %1039 = vmatmul.f32.gmra.mxu0 %v452
    %v1040 = vpop.f32.mrf.mxu0
    %v1041 = vadd.f32 %v1014, %v1040
    %1042 = vdwg.mxu0
    %1043 = vmatpush.msra.mxu0 %v954
    %1044 = vmatpush.msra.mxu0 %v951
    %1045 = vmatpush.msra.mxu0 %v948
    %1046 = vmatpush.msra.mxu0 %v945
    %1047 = vmatpush.msra.mxu0 %v942
    %1048 = vmatpush.msra.mxu0 %v939
    %1049 = vmatpush.msra.mxu0 %v936
    %1050 = vmatpush.msra.mxu0 %v933
    %1051 = vmatpush.msra.mxu0 %v930
    %1052 = vmatpush.msra.mxu0 %v927
    %1053 = vmatpush.msra.mxu0 %v924
    %1054 = vmatpush.msra.mxu0 %v921
    %1055 = vmatpush.msra.mxu0 %v918
    %1056 = vmatpush.msra.mxu0 %v915
    %1057 = vmatpush.msra.mxu0 %v912
    %1058 = vmatpush.msra.mxu0 %v909
    %1059 = vmatmul.f32.gmra.mxu0 %v453
    %v1060 = vpop.f32.mrf.mxu0
    %v1061 = vadd.f32 %v1041, %v1060
    %1062 = vdwg.mxu0
    %1063 = vmatpush.msra.mxu0 %v1002
    %1064 = vmatpush.msra.mxu0 %v999
    %1065 = vmatpush.msra.mxu0 %v996
    %1066 = vmatpush.msra.mxu0 %v993
    %1067 = vmatpush.msra.mxu0 %v990
    %1068 = vmatpush.msra.mxu0 %v987
    %1069 = vmatpush.msra.mxu0 %v984
    %1070 = vmatpush.msra.mxu0 %v981
    %1071 = vmatpush.msra.mxu0 %v978
    %1072 = vmatpush.msra.mxu0 %v975
    %1073 = vmatpush.msra.mxu0 %v972
    %1074 = vmatpush.msra.mxu0 %v969
    %1075 = vmatpush.msra.mxu0 %v966
    %1076 = vmatpush.msra.mxu0 %v963
    %1077 = vmatpush.msra.mxu0 %v960
    %1078 = vmatpush.msra.mxu0 %v957
    %1079 = vmatmul.f32.gmra.mxu0 %v454
    %v1080 = vpop.f32.mrf.mxu0
    %v1081 = vadd.f32 %v1061, %v1080
    %1082 = vdwg.mxu0
    %1083 = vmatpush.msra.mxu0 0.0
    %1084 = vmatpush.msra.mxu0 0.0
    %1085 = vmatpush.msra.mxu0 0.0
    %1086 = vmatpush.msra.mxu0 0.0
    %1087 = vmatpush.msra.mxu0 0.0
    %1088 = vmatpush.msra.mxu0 0.0
    %1089 = vmatpush.msra.mxu0 0.0
    %1090 = vmatpush.msra.mxu0 0.0
    %1091 = vmatpush.msra.mxu0 0.0
    %1092 = vmatpush.msra.mxu0 0.0
    %1093 = vmatpush.msra.mxu0 0.0
    %1094 = vmatpush.msra.mxu0 0.0
    %1095 = vmatpush.msra.mxu0 0.0
    %1096 = vmatpush.msra.mxu0 0.0
    %1097 = vmatpush.msra.mxu0 %v1008
    %1098 = vmatpush.msra.mxu0 %v1005
    %1099 = vmatmul.f32.gmra.mxu0 %v1021
    %v1100 = vpop.f32.mrf.mxu0
    %v1101 = vadd.f32 %v1081, %v1100
    %1102 = vdwg.mxu0
    %1103 = vmatpush.msra.mxu0 %v907
    %1104 = vmatpush.msra.mxu0 %v904
    %1105 = vmatpush.msra.mxu0 %v901
    %1106 = vmatpush.msra.mxu0 %v898
    %1107 = vmatpush.msra.mxu0 %v895
    %1108 = vmatpush.msra.mxu0 %v892
    %1109 = vmatpush.msra.mxu0 %v889
    %1110 = vmatpush.msra.mxu0 %v886
    %1111 = vmatpush.msra.mxu0 %v883
    %1112 = vmatpush.msra.mxu0 %v880
    %1113 = vmatpush.msra.mxu0 %v877
    %1114 = vmatpush.msra.mxu0 %v874
    %1115 = vmatpush.msra.mxu0 %v871
    %1116 = vmatpush.msra.mxu0 %v868
    %1117 = vmatpush.msra.mxu0 %v865
    %1118 = vmatpush.msra.mxu0 %v862
    %1119 = vmatmul.f32.gmra.mxu0 %v452
    %v1120 = vpop.f32.mrf.mxu0
    %v1121 = vadd.f32 %v1015, %v1120
    %1122 = vdwg.mxu0
    %1123 = vmatpush.msra.mxu0 %v955
    %1124 = vmatpush.msra.mxu0 %v952
    %1125 = vmatpush.msra.mxu0 %v949
    %1126 = vmatpush.msra.mxu0 %v946
    %1127 = vmatpush.msra.mxu0 %v943
    %1128 = vmatpush.msra.mxu0 %v940
    %1129 = vmatpush.msra.mxu0 %v937
    %1130 = vmatpush.msra.mxu0 %v934
    %1131 = vmatpush.msra.mxu0 %v931
    %1132 = vmatpush.msra.mxu0 %v928
    %1133 = vmatpush.msra.mxu0 %v925
    %1134 = vmatpush.msra.mxu0 %v922
    %1135 = vmatpush.msra.mxu0 %v919
    %1136 = vmatpush.msra.mxu0 %v916
    %1137 = vmatpush.msra.mxu0 %v913
    %1138 = vmatpush.msra.mxu0 %v910
    %1139 = vmatmul.f32.gmra.mxu0 %v453
    %v1140 = vpop.f32.mrf.mxu0
    %v1141 = vadd.f32 %v1121, %v1140
    %1142 = vdwg.mxu0
    %1143 = vmatpush.msra.mxu0 %v1003
    %1144 = vmatpush.msra.mxu0 %v1000
    %1145 = vmatpush.msra.mxu0 %v997
    %1146 = vmatpush.msra.mxu0 %v994
    %1147 = vmatpush.msra.mxu0 %v991
    %1148 = vmatpush.msra.mxu0 %v988
    %1149 = vmatpush.msra.mxu0 %v985
    %1150 = vmatpush.msra.mxu0 %v982
    %1151 = vmatpush.msra.mxu0 %v979
    %1152 = vmatpush.msra.mxu0 %v976
    %1153 = vmatpush.msra.mxu0 %v973
    %1154 = vmatpush.msra.mxu0 %v970
    %1155 = vmatpush.msra.mxu0 %v967
    %1156 = vmatpush.msra.mxu0 %v964
    %1157 = vmatpush.msra.mxu0 %v961
    %1158 = vmatpush.msra.mxu0 %v958
    %1159 = vmatmul.f32.gmra.mxu0 %v454
    %v1160 = vpop.f32.mrf.mxu0
    %v1161 = vadd.f32 %v1141, %v1160
    %1162 = vdwg.mxu0
    %1163 = vmatpush.msra.mxu0 0.0
    %1164 = vmatpush.msra.mxu0 0.0
    %1165 = vmatpush.msra.mxu0 0.0
    %1166 = vmatpush.msra.mxu0 0.0
    %1167 = vmatpush.msra.mxu0 0.0
    %1168 = vmatpush.msra.mxu0 0.0
    %1169 = vmatpush.msra.mxu0 0.0
    %1170 = vmatpush.msra.mxu0 0.0
    %1171 = vmatpush.msra.mxu0 0.0
    %1172 = vmatpush.msra.mxu0 0.0
    %1173 = vmatpush.msra.mxu0 0.0
    %1174 = vmatpush.msra.mxu0 0.0
    %1175 = vmatpush.msra.mxu0 0.0
    %1176 = vmatpush.msra.mxu0 0.0
    %1177 = vmatpush.msra.mxu0 %v1009
    %1178 = vmatpush.msra.mxu0 %v1006
    %1179 = vmatmul.f32.gmra.mxu0 %v1021
    %v1180 = vpop.f32.mrf.mxu0
    %v1181 = vadd.f32 %v1161, %v1180
    %1182 = vdwg.mxu0
    %1183 = vmatpush.msra.mxu0 %v908
    %1184 = vmatpush.msra.mxu0 %v905
    %1185 = vmatpush.msra.mxu0 %v902
    %1186 = vmatpush.msra.mxu0 %v899
    %1187 = vmatpush.msra.mxu0 %v896
    %1188 = vmatpush.msra.mxu0 %v893
    %1189 = vmatpush.msra.mxu0 %v890
    %1190 = vmatpush.msra.mxu0 %v887
    %1191 = vmatpush.msra.mxu0 %v884
    %1192 = vmatpush.msra.mxu0 %v881
    %1193 = vmatpush.msra.mxu0 %v878
    %1194 = vmatpush.msra.mxu0 %v875
    %1195 = vmatpush.msra.mxu0 %v872
    %1196 = vmatpush.msra.mxu0 %v869
    %1197 = vmatpush.msra.mxu0 %v866
    %1198 = vmatpush.msra.mxu0 %v863
    %1199 = vmatmul.f32.gmra.mxu0 %v452
    %v1200 = vpop.f32.mrf.mxu0
    %v1201 = vadd.f32 %v1016, %v1200
    %1202 = vdwg.mxu0
    %1203 = vmatpush.msra.mxu0 %v956
    %1204 = vmatpush.msra.mxu0 %v953
    %1205 = vmatpush.msra.mxu0 %v950
    %1206 = vmatpush.msra.mxu0 %v947
    %1207 = vmatpush.msra.mxu0 %v944
    %1208 = vmatpush.msra.mxu0 %v941
    %1209 = vmatpush.msra.mxu0 %v938
    %1210 = vmatpush.msra.mxu0 %v935
    %1211 = vmatpush.msra.mxu0 %v932
    %1212 = vmatpush.msra.mxu0 %v929
    %1213 = vmatpush.msra.mxu0 %v926
    %1214 = vmatpush.msra.mxu0 %v923
    %1215 = vmatpush.msra.mxu0 %v920
    %1216 = vmatpush.msra.mxu0 %v917
    %1217 = vmatpush.msra.mxu0 %v914
    %1218 = vmatpush.msra.mxu0 %v911
    %1219 = vmatmul.f32.gmra.mxu0 %v453
    %v1220 = vpop.f32.mrf.mxu0
    %v1221 = vadd.f32 %v1201, %v1220
    %1222 = vdwg.mxu0
    %1223 = vmatpush.msra.mxu0 %v1004
    %1224 = vmatpush.msra.mxu0 %v1001
    %1225 = vmatpush.msra.mxu0 %v998
    %1226 = vmatpush.msra.mxu0 %v995
    %1227 = vmatpush.msra.mxu0 %v992
    %1228 = vmatpush.msra.mxu0 %v989
    %1229 = vmatpush.msra.mxu0 %v986
    %1230 = vmatpush.msra.mxu0 %v983
    %1231 = vmatpush.msra.mxu0 %v980
    %1232 = vmatpush.msra.mxu0 %v977
    %1233 = vmatpush.msra.mxu0 %v974
    %1234 = vmatpush.msra.mxu0 %v971
    %1235 = vmatpush.msra.mxu0 %v968
    %1236 = vmatpush.msra.mxu0 %v965
    %1237 = vmatpush.msra.mxu0 %v962
    %1238 = vmatpush.msra.mxu0 %v959
    %1239 = vmatmul.f32.gmra.mxu0 %v454
    %v1240 = vpop.f32.mrf.mxu0
    %v1241 = vadd.f32 %v1221, %v1240
    %1242 = vdwg.mxu0
    %1243 = vmatpush.msra.mxu0 0.0
    %1244 = vmatpush.msra.mxu0 0.0
    %1245 = vmatpush.msra.mxu0 0.0
    %1246 = vmatpush.msra.mxu0 0.0
    %1247 = vmatpush.msra.mxu0 0.0
    %1248 = vmatpush.msra.mxu0 0.0
    %1249 = vmatpush.msra.mxu0 0.0
    %1250 = vmatpush.msra.mxu0 0.0
    %1251 = vmatpush.msra.mxu0 0.0
    %1252 = vmatpush.msra.mxu0 0.0
    %1253 = vmatpush.msra.mxu0 0.0
    %1254 = vmatpush.msra.mxu0 0.0
    %1255 = vmatpush.msra.mxu0 0.0
    %1256 = vmatpush.msra.mxu0 0.0
    %1257 = vmatpush.msra.mxu0 %v1010
    %1258 = vmatpush.msra.mxu0 %v1007
    %1259 = vmatmul.f32.gmra.mxu0 %v1021
    %v1260 = vpop.f32.mrf.mxu0
    %v1261 = vadd.f32 %v1241, %v1260
    %1262 = vdwg.mxu0
    %v1263 = vmax.f32 %v1101, 0.0
    %v1264 = vmax.f32 %v1181, 0.0
    %v1265 = vmax.f32 %v1261, 0.0
    %v1266 = vld [vmem:[%s7] ss:$2 sm:$0x7]
    %v1268 = vperm.slane %v1266, 0
    %v1269 = vperm.slane %v1266, 1
    %v1270 = vperm.slane %v1266, 2
    %v1274 = vmul.f32 %v858, %v1268
    %v1275 = vmul.f32 %v859, %v1269
    %v1276 = vmul.f32 %v860, %v1270
    %v1277 = vadd.f32 %v1274, %v1275
    %vm1278 = vcmask 359424
    %v1279 = vsel %vm1278, %v1276, 0.0
    %v1280 = vadd.f32 %v1277, %v1279
    %1281 = vadd.xlane.f32.xlu0 %v1280
    %v1282 = vpop.xlane.xlu0 %1281
    %s1283 = scalar_lea.vmem %s7, 1
    %v1284 = vld [vmem:[%s1283] ss:$2 sm:$0x7]
    %v1286 = vperm.slane %v1284, 0
    %v1287 = vperm.slane %v1284, 1
    %v1288 = vperm.slane %v1284, 2
    %v1292 = vmul.f32 %v1263, %v1286
    %v1293 = vmul.f32 %v1264, %v1287
    %v1294 = vmul.f32 %v1265, %v1288
    %v1295 = vadd.f32 %v1292, %v1293
    %v1296 = vsel %vm1278, %v1294, 0.0
    %v1297 = vadd.f32 %v1295, %v1296
    %1298 = vadd.xlane.f32.xlu0 %v1297
    %v1299 = vpop.xlane.xlu0 %1298
    %vm1300 = vcmask 7168
    %v1301 = vsel %vm1300, %v1282, %v1299
    %v1302 = vld [vmem:[%s8] sm:$0x1]
    %v1304 = vperm.slane %v1302, 0
    %v1306 = vadd.f32 %v1301, %v1304
    %vm1307 = vcmask 15360
    %v1308 = vsel %vm1307, %v1306, 0.0
    %1309 = vst [vmem:[%s9] sm:$0xff] %v1308
    // Predicated region
    $region54: #{critic_forward.1} parent=1 // pred_check
      _
    $region55: #{critic_forward.1} parent=1 // pred_check_branch
      %1311 = sbr.rel (0) target = $region57
    $region56: #{critic_forward.1} parent=1 // pred_region
      _
    $region57: #{critic_forward.1} parent=1 // pred_fallthru
      _
    // Predicated region
    $region58: #{critic_forward.1} parent=1 // pred_check
      _
    $region59: #{critic_forward.1} parent=1 // pred_check_branch
      %1313 = sbr.rel (0) target = $region61
    $region60: #{critic_forward.1} parent=1 // pred_region
      _
    $region61: #{critic_forward.1} parent=1 // pred_fallthru
      _
    %1314 = vsyncpa [#allocation3], 1
    %1315 = vsyncpa [#allocation5], 1
    %1316 = vsyncpa [#allocation8], 1

</llo_original>
